<compile_context>
chip_gen: v7x
topology: tpu7x:2x2x1
jax: 0.10.0
libtpu: 0.0.40
codegen_flags: <defaults>
</compile_context>

<pallas_src>
import math

import jax
import jax.numpy as jnp
from jax.experimental import pallas as pl
from jax.experimental.pallas import tpu as pltpu


# --------------------------------------------------------------------------- kernel
def _pos_embed_kernel(embed_ref, coef_ref, out_ref):
    # embed_ref: (1, 2, HW) f32 -- row 0 = y_embed, row 1 = x_embed (normalized already)
    # coef_ref : (f_tile, 2) f32 -- col 0 = 1/dim_t, col 1 = (c % 2) * pi/2
    # out_ref  : (1, 1, f_tile, HW) f32
    half = pl.program_id(1)                       # 0 -> y-half channels, 1 -> x-half
    e = jnp.where(half == 0,
                  embed_ref[0, 0:1, :],           # (1, HW)
                  embed_ref[0, 1:2, :])           # (1, HW)
    inv = coef_ref[:, 0:1]                        # (f_tile, 1)
    ph = coef_ref[:, 1:2]                         # (f_tile, 1)
    # angle[c, p] = embed[p] * inv_dim_t[c] + (c % 2) * pi/2 ; one sin covers sin & cos.
    out_ref[0, 0] = jnp.sin(e * inv + ph)


# --------------------------------------------------------------------------- tiling
def _round_up(x, m):
    return ((x + m - 1) // m) * m


def _vmem_budget():
    """Generation-aware (vmem_limit_bytes, per-step target bytes)."""
    try:
        cap = int(pltpu.get_tpu_info().vmem_capacity_bytes)
    except Exception:
        cap = 64 * 1024 * 1024                    # conservative (v7x-sized) fallback
    limit = min(cap * 3 // 4, 64 * 1024 * 1024)   # <=48 MiB on v7x, <=64 MiB elsewhere
    per_step = min(8 * 1024 * 1024, limit // 4)
    return limit, per_step


def _pick_f_tile(F, HW, target_bytes):
    """Largest divisor of F (multiple of 8, or F itself) whose padded, double-buffered
    footprint fits the per-step target."""
    hw_pad = _round_up(HW, 128)
    candidates = [d for d in range(F, 0, -1) if F % d == 0 and (d == F or d % 8 == 0)]
    for d in candidates:
        out_bytes = 2 * _round_up(d, 8) * hw_pad * 4       # output block, double-buffered
        embed_bytes = 2 * 8 * hw_pad * 4                    # (1,2,HW) pads to (8, hw_pad)
        coef_bytes = 2 * _round_up(d, 8) * 128 * 4          # (d,2) pads lanes to 128
        if out_bytes + embed_bytes + coef_bytes <= target_bytes:
            return d
    return candidates[-1]


# --------------------------------------------------------------------------- wrapper
def position_embedding_sine(x, mask, num_pos_feats=64, temperature=10000,
                            normalize=False, scale=None):
    """JAX/Pallas equivalent of PositionEmbeddingSine.forward(x, mask).

    x    : unused (kept for signature parity with the PyTorch module).
    mask : (B, H, W) bool, True = padded position.
    returns (B, 2*num_pos_feats, H, W) float32 (NCHW, like PyTorch).
    """
    del x
    if scale is not None and normalize is False:
        raise ValueError('normalize should be True if scale is passed')
    if scale is None:
        scale = 2 * math.pi

    B, H, W = mask.shape
    F = int(num_pos_feats)
    HW = H * W

    # --- tiny O(B*H*W) prep in the wrapper (exactly mirrors torch.cumsum semantics) ---
    not_mask = (~mask).astype(jnp.float32)
    y_embed = jnp.cumsum(not_mask, axis=1)
    x_embed = jnp.cumsum(not_mask, axis=2)
    if normalize:
        eps = 1e-6
        y_embed = y_embed / (y_embed[:, -1:, :] + eps) * scale
        x_embed = x_embed / (x_embed[:, :, -1:] + eps) * scale
    embed = jnp.stack([y_embed, x_embed], axis=1).reshape(B, 2, HW)        # (B, 2, HW)

    # Packed per-channel coefficients: col 0 = 1/dim_t, col 1 = phase (cos = sin(+pi/2)).
    i = jnp.arange(F, dtype=jnp.float32)
    dim_t = float(temperature) ** (2.0 * jnp.floor(i / 2.0) / float(F))
    coef = jnp.stack([1.0 / dim_t, (i % 2.0) * (math.pi / 2.0)], axis=1)   # (F, 2)

    vmem_limit, per_step_target = _vmem_budget()
    f_tile = _pick_f_tile(F, HW, per_step_target)
    grid = (B, 2, F // f_tile)        # half-axis guarantees >= 2 (even) grid steps

    out = pl.pallas_call(
        _pos_embed_kernel,
        out_shape=jax.ShapeDtypeStruct((B, 2, F, HW), jnp.float32),
        grid_spec=pltpu.PrefetchScalarGridSpec(
            num_scalar_prefetch=0,
            grid=grid,
            in_specs=[
                pl.BlockSpec((1, 2, HW), lambda b, h, f: (b, 0, 0)),       # embeds (per batch)
                pl.BlockSpec((f_tile, 2), lambda b, h, f: (f, 0)),          # coefficients
            ],
            out_specs=pl.BlockSpec((1, 1, f_tile, HW), lambda b, h, f: (b, h, f, 0)),
        ),
        compiler_params=pltpu.CompilerParams(
            dimension_semantics=("parallel", "parallel", "parallel"),
            vmem_limit_bytes=int(vmem_limit),
        ),
    )(embed, coef)

    # (B, 2, F, H*W) -> (B, 2F, H, W): contiguous reshape, no transpose / data movement.
    # TODO(synk): optionally emit bf16 output on v5e to halve HBM writeback (numerics-visible).
    return out.reshape(B, 2 * F, H, W)


# --------------------------------------------------------------------------- reference
def _reference(mask, num_pos_feats=64, temperature=10000, normalize=False, scale=None):
    """Pure-JAX reference mirroring the PyTorch forward."""
    if scale is None:
        scale = 2 * math.pi
    not_mask = (~mask).astype(jnp.float32)
    y_embed = jnp.cumsum(not_mask, axis=1)
    x_embed = jnp.cumsum(not_mask, axis=2)
    if normalize:
        eps = 1e-6
        y_embed = y_embed / (y_embed[:, -1:, :] + eps) * scale
        x_embed = x_embed / (x_embed[:, :, -1:] + eps) * scale
    dim_t = jnp.arange(num_pos_feats, dtype=jnp.float32)
    dim_t = float(temperature) ** (2.0 * jnp.floor(dim_t / 2.0) / num_pos_feats)
    pos_x = x_embed[:, :, :, None] / dim_t
    pos_y = y_embed[:, :, :, None] / dim_t
    B, H, W = mask.shape
    pos_x = jnp.stack((jnp.sin(pos_x[:, :, :, 0::2]), jnp.cos(pos_x[:, :, :, 1::2])),
                      axis=4).reshape(B, H, W, -1)
    pos_y = jnp.stack((jnp.sin(pos_y[:, :, :, 0::2]), jnp.cos(pos_y[:, :, :, 1::2])),
                      axis=4).reshape(B, H, W, -1)
    pos = jnp.concatenate((pos_y, pos_x), axis=3).transpose(0, 3, 1, 2)
    return pos


if __name__ == "__main__":
    key = jax.random.PRNGKey(0)
    B, Cin, H, W = 2, 4, 16, 16
    num_pos_feats = 64

    kx, km = jax.random.split(key)
    x = jax.random.normal(kx, (B, Cin, H, W), dtype=jnp.float32)   # unused by forward
    mask = jax.random.bernoulli(km, 0.3, (B, H, W))                # True = padded

    # default config (normalize=False), like the PyTorch module defaults
    pos = position_embedding_sine(x, mask, num_pos_feats=num_pos_feats)
    pos = jax.block_until_ready(pos)
    ref = _reference(mask, num_pos_feats=num_pos_feats)
    assert pos.shape == (B, 2 * num_pos_feats, H, W)
    assert jnp.allclose(pos, ref, rtol=1e-5, atol=1e-5), \
        float(jnp.max(jnp.abs(pos - ref)))

    # normalized variant (as used in DETR with scale=2*pi)
    pos_n = position_embedding_sine(x, mask, num_pos_feats=num_pos_feats,
                                    normalize=True, scale=2 * math.pi)
    pos_n = jax.block_until_ready(pos_n)
    ref_n = _reference(mask, num_pos_feats=num_pos_feats, normalize=True,
                       scale=2 * math.pi)
    assert jnp.allclose(pos_n, ref_n, rtol=1e-5, atol=1e-5), \
        float(jnp.max(jnp.abs(pos_n - ref_n)))

    print("KERNEL_OK")
</pallas_src>

<mosaic_0001>
module attributes {stable_mosaic.version = 11 : i64} {
  func.func @_pos_embed_kernel(%arg0: i32, %arg1: i32, %arg2: i32, %arg3: memref<1x2x256xf32, #tpu.memory_space<vmem>>, %arg4: memref<64x2xf32, #tpu.memory_space<vmem>>, %arg5: memref<1x1x64x256xf32, #tpu.memory_space<vmem>>) attributes {dimension_semantics = [#tpu.dimension_semantics<parallel>, #tpu.dimension_semantics<parallel>, #tpu.dimension_semantics<parallel>], iteration_bounds = array<i64: 2, 2, 1>, scalar_prefetch = 0 : i64, scratch_operands = 0 : i64, tpu.core_type = #tpu.core_type<tc>, window_params = [{transform_indices = @transform_0, window_bounds = array<i64: 1, 2, 256>}, {transform_indices = @transform_1, window_bounds = array<i64: 64, 2>}, {transform_indices = @transform_2, window_bounds = array<i64: 1, 1, 64, 256>}]} {
    %c0_i32 = arith.constant 0 : i32
    %0 = arith.cmpi eq, %arg1, %c0_i32 : i32
    %c0 = arith.constant 0 : index
    %c0_0 = arith.constant 0 : index
    %c0_1 = arith.constant 0 : index
    %1 = vector.load %arg3[%c0, %c0_0, %c0_1] : memref<1x2x256xf32, #tpu.memory_space<vmem>>, vector<1x1x256xf32>
    %2 = vector.shape_cast %1 : vector<1x1x256xf32> to vector<1x256xf32>
    %c0_2 = arith.constant 0 : index
    %c1 = arith.constant 1 : index
    %c0_3 = arith.constant 0 : index
    %3 = vector.load %arg3[%c0_2, %c1, %c0_3] : memref<1x2x256xf32, #tpu.memory_space<vmem>>, vector<1x1x256xf32>
    %4 = vector.shape_cast %3 : vector<1x1x256xf32> to vector<1x256xf32>
    %5 = arith.select %0, %2, %4 : vector<1x256xf32>
    %c0_4 = arith.constant 0 : index
    %c0_5 = arith.constant 0 : index
    %6 = vector.load %arg4[%c0_4, %c0_5] : memref<64x2xf32, #tpu.memory_space<vmem>>, vector<64x1xf32>
    %c0_6 = arith.constant 0 : index
    %c1_7 = arith.constant 1 : index
    %7 = vector.load %arg4[%c0_6, %c1_7] : memref<64x2xf32, #tpu.memory_space<vmem>>, vector<64x1xf32>
    %8 = vector.broadcast %5 : vector<1x256xf32> to vector<64x256xf32>
    %9 = vector.broadcast %6 : vector<64x1xf32> to vector<64x256xf32>
    %10 = arith.mulf %8, %9 : vector<64x256xf32>
    %11 = vector.broadcast %7 : vector<64x1xf32> to vector<64x256xf32>
    %12 = arith.addf %10, %11 : vector<64x256xf32>
    %13 = math.sin %12 : vector<64x256xf32>
    %c0_8 = arith.constant 0 : index
    %c0_9 = arith.constant 0 : index
    %c0_10 = arith.constant 0 : index
    %c0_11 = arith.constant 0 : index
    %14 = vector.load %arg5[%c0_8, %c0_9, %c0_10, %c0_11] : memref<1x1x64x256xf32, #tpu.memory_space<vmem>>, vector<1x1x64x256xf32>
    %15 = vector.shape_cast %14 : vector<1x1x64x256xf32> to vector<64x256xf32>
    %16 = vector.shape_cast %13 : vector<64x256xf32> to vector<1x1x64x256xf32>
    tpu.vector_store %arg5[%c0_8, %c0_9, %c0_10, %c0_11], %16 {strides = array<i32>} : memref<1x1x64x256xf32, #tpu.memory_space<vmem>>, vector<1x1x64x256xf32>,
    return
  }
  func.func @transform_0(%arg0: i32, %arg1: i32, %arg2: i32) -> (i32, i32, i32) {
    %c0_i32 = arith.constant 0 : i32
    %c0_i32_0 = arith.constant 0 : i32
    %c0_i32_1 = arith.constant 0 : i32
    return %arg0, %c0_i32, %c0_i32_0 : i32, i32, i32
  }
  func.func @transform_1(%arg0: i32, %arg1: i32, %arg2: i32) -> (i32, i32) {
    %c0_i32 = arith.constant 0 : i32
    %c0_i32_0 = arith.constant 0 : i32
    return %arg2, %c0_i32 : i32, i32
  }
  func.func @transform_2(%arg0: i32, %arg1: i32, %arg2: i32) -> (i32, i32, i32, i32) {
    %c0_i32 = arith.constant 0 : i32
    %c0_i32_0 = arith.constant 0 : i32
    return %arg0, %arg1, %arg2, %c0_i32 : i32, i32, i32, i32
  }
}

</mosaic_0001>

<llo_original>
// kernel: tpu_custom_call.1
$region0: #{tpu_custom_call.1}
  #allocation0 [shape = 'u32[]', space=smem, size = 0x4, offset = 0x4, fixed_abs, tag = 'smem constant byte address 0x4 - core index']
  #allocation1 [shape = 'u32[144,128]{1,0:T(1,128)}', space=vmem, size = 0x12000, scoped, tag = 'internal scratch']
  %s0 = inlined_call_operand.vmem [shape: f32[2,2,256], index: 0, kind: input, shape index: {}]
  %s1 = inlined_call_operand.vmem [shape: f32[64,2], index: 1, kind: input, shape index: {}]
  %s2 = inlined_call_operand.hbm [shape: f32[2,2,64,256], index: 2, kind: output, shape index: {}]
  %s3 = sld [smem:[#allocation0]]
  $region41: #{tpu_custom_call.1} parent=0
    _
  %s5 = ssub.s32 1, %s3
  %s6 = scalar_select 0, %s5, %s3
  $region1: #{tpu_custom_call.1} parent=0
    #allocation2 [shape = 'u8[131072]{0}', space=vmem, size = 0x20000, scoped, tag = 'output window, operand 0']
    #allocation3 [shape = 's32[2]{0}', space=sflag, size = 0x8, scoped, tag = 'scoped memory for tpu_custom_call.1']
    %7 = vsyncpa [#allocation3], 0
    %s8 = scalar_lea.sflag [#allocation3], 1
    %9 = vsyncpa %s8, 0
    loop: start=0, step=1, limit=6
    $region2: #{tpu_custom_call.1} parent=1 // loop_pre_header
      _
    $region3: #{tpu_custom_call.1} parent=1 // loop_header
      %s11 = sphi 0, %s15
      %p12 = scmp.ge.s32.totalorder %s11, 6
      %s18 = sphi 0, %s37
      %s19 = sphi 0, %s33
      %s20 = sphi 0, %s29
      %s21 = sphi 0, %s18
      %s22 = sphi 0, %s19
      %s23 = sphi 0, %s20
      %s24 = sphi 0, %s21
      %s25 = sphi 0, %s22
      %s26 = sphi 0, %s23
      %s40 = sphi 0, %s42
      %s43 = sphi 0, %s40
      %s44 = sphi 0, %s43
      %s60 = sphi 0, %s44
      %s66 = sphi 0, %s68
      %s69 = sphi 0, %s66
      %s70 = sphi 0, %s69
      %s86 = sphi 0, %s70
      %s96 = sphi 0, %s98
      %s99 = sphi 0, %s96
      %s100 = sphi 0, %s99
      %s116 = sphi 0, %s100
    $region4: #{tpu_custom_call.1} parent=1 // loop_header_branch
      %14 = sbr.rel (%p12) target = $region8
    $region5: #{tpu_custom_call.1} parent=1 // loop_body
      %s16 = ssub.s32 %s11, 1
      %s17 = ssub.s32 %s11, 2
      %s27 = sadd.s32 1, %s20
      %p28 = scmp.ge.s32.totalorder %s27, 1
      %s29 = scalar_select %p28, 0, %s27
      %s30 = sadd.s32 1, %s19
      %s31 = scalar_select %p28, %s30, %s19
      %p32 = scmp.ge.s32.totalorder %s31, 2
      %s33 = scalar_select %p32, 0, %s31
      %s34 = sadd.s32 1, %s18
      %s35 = scalar_select %p32, %s34, %s18
      %p36 = scmp.ge.s32.totalorder %s35, 2
      %s37 = scalar_select %p36, 0, %s35
      %s38 = ssub.s32 %s18, %s37
      %p39 = scmp.eq.s32.totalorder %s38, 0
      %s41 = sadd.s32 %s40, 1
      %s42 = scalar_select %p39, %s40, %s41
      %p45 = pneg %p39
      %p46 = scmp.eq.s32.totalorder %s11, 3
      %p47 = por %p45, %p46
      %p48 = scmp.ne.s32.totalorder %s40, %s43
      %p49 = scmp.eq.s32.totalorder %s11, 0
      %p50 = por %p48, %p49
      %p51 = scmp.ne.s32.totalorder %s40, %s43
      %p52 = scmp.eq.s32.totalorder %s16, 3
      %p53 = por %p51, %p52
      %p54 = scmp.ne.s32.totalorder %s43, %s44
      %p55 = scmp.eq.s32.totalorder %s16, 0
      %p56 = por %p54, %p55
      %p57 = scmp.ne.s32.totalorder %s43, %s44
      %p58 = scmp.eq.s32.totalorder %s17, 3
      %p59 = por %p57, %p58
      %p61 = scmp.ne.s32.totalorder %s44, %s60
      %p62 = scmp.eq.s32.totalorder %s17, 0
      %p63 = por %p61, %p62
      %s64 = ssub.s32 %s20, %s29
      %p65 = scmp.eq.s32.totalorder %s64, 0
      %s67 = sadd.s32 %s66, 1
      %s68 = scalar_select %p65, %s66, %s67
      %p71 = pneg %p65
      %p72 = scmp.eq.s32.totalorder %s11, 3
      %p73 = por %p71, %p72
      %p74 = scmp.ne.s32.totalorder %s66, %s69
      %p75 = scmp.eq.s32.totalorder %s11, 0
      %p76 = por %p74, %p75
      %p77 = scmp.ne.s32.totalorder %s66, %s69
      %p78 = scmp.eq.s32.totalorder %s16, 3
      %p79 = por %p77, %p78
      %p80 = scmp.ne.s32.totalorder %s69, %s70
      %p81 = scmp.eq.s32.totalorder %s16, 0
      %p82 = por %p80, %p81
      %p83 = scmp.ne.s32.totalorder %s69, %s70
      %p84 = scmp.eq.s32.totalorder %s17, 3
      %p85 = por %p83, %p84
      %p87 = scmp.ne.s32.totalorder %s70, %s86
      %p88 = scmp.eq.s32.totalorder %s17, 0
      %p89 = por %p87, %p88
      %s90 = ssub.s32 %s18, %s37
      %s91 = ssub.s32 %s19, %s33
      %s92 = sor.u32 %s90, %s91
      %s93 = ssub.s32 %s20, %s29
      %s94 = sor.u32 %s92, %s93
      %p95 = scmp.eq.s32.totalorder %s94, 0
      %s97 = sadd.s32 %s96, 1
      %s98 = scalar_select %p95, %s96, %s97
      %p101 = pneg %p95
      %p102 = scmp.eq.s32.totalorder %s11, 3
      %p103 = por %p101, %p102
      %p104 = scmp.ne.s32.totalorder %s96, %s99
      %p105 = scmp.eq.s32.totalorder %s11, 0
      %p106 = por %p104, %p105
      %p107 = scmp.ne.s32.totalorder %s96, %s99
      %p108 = scmp.eq.s32.totalorder %s16, 3
      %p109 = por %p107, %p108
      %p110 = scmp.ne.s32.totalorder %s99, %s100
      %p111 = scmp.eq.s32.totalorder %s16, 0
      %p112 = por %p110, %p111
      %p113 = scmp.ne.s32.totalorder %s99, %s100
      %p114 = scmp.eq.s32.totalorder %s17, 3
      %p115 = por %p113, %p114
      %p117 = scmp.ne.s32.totalorder %s100, %s116
      %p118 = scmp.eq.s32.totalorder %s17, 0
      %p119 = por %p117, %p118
      %p120 = scmp.le.s32.totalorder 1, %s11
      %p121 = scmp.lt.s32.totalorder %s11, 5
      %p122 = pnand %p120, %p121
      %p123 = pneg %p122
      // Predicated region
      $region9: #{tpu_custom_call.1} parent=5 // pred_check
        _
      $region10: #{tpu_custom_call.1} parent=5 // pred_check_branch
        %125 = sbr.rel (%p122) target = $region12
      $region11: #{tpu_custom_call.1} parent=5 // pred_region
        %s126 = ssub.s32 %s11, 1
        // Predicated region
        $region13: #{tpu_custom_call.1} parent=11 // pred_check
          %p127 = pneg %p82
        $region14: #{tpu_custom_call.1} parent=11 // pred_check_branch
          %129 = sbr.rel (%p127) target = $region16
        $region15: #{tpu_custom_call.1} parent=11 // pred_region
          %s130 = smul.u32 8, %s23
          %p131 = scmp.lt.s32.totalorder %s130, 7
          %s132 = scalar_select %p131, %s130, 7
          %s133 = smul.addr %s132, 8
          %s134 = scalar_lea.vmem %s1, %s133
          %s135 = smul.u32 8, %s23
        $region16: #{tpu_custom_call.1} parent=11 // pred_fallthru
          _
      $region12: #{tpu_custom_call.1} parent=5 // pred_fallthru
        _
      %p136 = scmp.lt.s32.totalorder %s11, 4
      // Predicated region
      $region17: #{tpu_custom_call.1} parent=5 // pred_check
        %p137 = pneg %p136
      $region18: #{tpu_custom_call.1} parent=5 // pred_check_branch
        %139 = sbr.rel (%p137) target = $region20
      $region19: #{tpu_custom_call.1} parent=5 // pred_region
        // Predicated region
        $region21: #{tpu_custom_call.1} parent=19 // pred_check
          %p140 = pneg %p50
        $region22: #{tpu_custom_call.1} parent=19 // pred_check_branch
          %142 = sbr.rel (%p140) target = $region24
        $region23: #{tpu_custom_call.1} parent=19 // pred_region
          %p143 = scmp.lt.s32.totalorder %s18, 1
          %s144 = scalar_select %p143, %s18, 1
          %s145 = smul.addr %s144, 2
          %s146 = smul.addr %s145, 2
          %s147 = scalar_lea.vmem %s0, %s146
        $region24: #{tpu_custom_call.1} parent=19 // pred_fallthru
          _
      $region20: #{tpu_custom_call.1} parent=5 // pred_fallthru
        _
      %p148 = scmp.le.s32.totalorder 1, %s11
      %p149 = scmp.lt.s32.totalorder %s11, 5
      %p150 = pnand %p148, %p149
      %p151 = pneg %p150
      // Predicated region
      $region25: #{tpu_custom_call.1} parent=5 // pred_check
        _
      $region26: #{tpu_custom_call.1} parent=5 // pred_check_branch
        %153 = sbr.rel (%p150) target = $region28
      $region27: #{tpu_custom_call.1} parent=5 // pred_region
        %s154 = ssub.s32 %s11, 1
        %p155 = scmp.lt.s32.totalorder %s21, 1
        %s156 = scalar_select %p155, %s21, 1
        %s157 = smul.addr %s156, 2
        %s158 = smul.addr %s157, 2
        %s159 = scalar_lea.vmem %s0, %s158
        %p160 = pneg %p56
        %p161 = pneg %p53
        %s162 = smul.u32 8, %s23
        %p163 = scmp.lt.s32.totalorder %s162, 7
        %s164 = scalar_select %p163, %s162, 7
        %s165 = smul.addr %s164, 8
        %s166 = scalar_lea.vmem %s1, %s165
        %p167 = pneg %p82
        %p168 = pneg %p79
        %p169 = pneg %p112
        %p170 = pneg %p109
        %s171 = sand.u32 %s99, 1
        %s172 = scalar_lea.sflag [#allocation3], %s171
        %s173 = sand.u32 %s99, 1
        %s174 = smul.addr %s173, 128
        %s175 = scalar_lea.vmem [#allocation2], %s174
        %p176 = scmp.lt.s32.totalorder %s21, 1
        %s177 = scalar_select %p176, %s21, 1
        %s178 = smul.addr %s177, 2
        %s179 = smul.addr %s178, 2
        %s180 = scalar_lea.vmem %s0, %s179
        %s181 = smul.u32 8, %s23
        %p182 = scmp.lt.s32.totalorder %s181, 7
        %s183 = scalar_select %p182, %s181, 7
        %s184 = smul.addr %s183, 8
        %s185 = scalar_lea.vmem %s1, %s184
        %s186 = smul.u32 8, %s23
        %s187 = smul.u32 8, %s23
        %p188 = scmp.eq.s32.totalorder %s22, 0
        %v189 = vld [vmem:[%s180] ss:$2 sm:$0x3]
        %s190 = scalar_lea.vmem %s180, 1
        %v191 = vld [vmem:[%s190] ss:$2 sm:$0x3]
        %s192 = scalar_select %p188, 1, 0
        %v193 = vstv %s192
        %vm194 = vcmp.eq.s32.totalorder %v193, 1
        %v195 = vsel %vm194, %v189, %v191
        %v196 = vld [vmem:[%s185] sm:$0xff]
        %v197 = vld [vmem:[%s185 + $0x8] sm:$0xff]
        %v198 = vld [vmem:[%s185 + $0x10] sm:$0xff]
        %v199 = vld [vmem:[%s185 + $0x18] sm:$0xff]
        %v200 = vld [vmem:[%s185 + $0x20] sm:$0xff]
        %v201 = vld [vmem:[%s185 + $0x28] sm:$0xff]
        %v202 = vld [vmem:[%s185 + $0x30] sm:$0xff]
        %v203 = vld [vmem:[%s185 + $0x38] sm:$0xff]
        %v205 = vlaneseq
        %v206 = vshrl.u32 %v205, 7
        %v207 = vsub.s32 0, %v206
        %v208 = vrot.slane %v195, %v207
        %v209 = vlaneseq
        %v210 = vshrl.u32 %v209, 7
        %v211 = vsub.s32 1, %v210
        %v212 = vrot.slane %v195, %v211
        %216 = vset.pattern.permute.xlu0 0
        %217 = vperm.xlu0 %216, %v196
        %v218 = vpop.permute.xlu0 %217
        %221 = vset.pattern.permute.xlu0 0
        %222 = vperm.xlu0 %221, %v197
        %v223 = vpop.permute.xlu0 %222
        %226 = vset.pattern.permute.xlu0 0
        %227 = vperm.xlu0 %226, %v198
        %v228 = vpop.permute.xlu0 %227
        %231 = vset.pattern.permute.xlu0 0
        %232 = vperm.xlu0 %231, %v199
        %v233 = vpop.permute.xlu0 %232
        %236 = vset.pattern.permute.xlu0 0
        %237 = vperm.xlu0 %236, %v200
        %v238 = vpop.permute.xlu0 %237
        %241 = vset.pattern.permute.xlu0 0
        %242 = vperm.xlu0 %241, %v201
        %v243 = vpop.permute.xlu0 %242
        %246 = vset.pattern.permute.xlu0 0
        %247 = vperm.xlu0 %246, %v202
        %v248 = vpop.permute.xlu0 %247
        %251 = vset.pattern.permute.xlu0 0
        %252 = vperm.xlu0 %251, %v203
        %v253 = vpop.permute.xlu0 %252
        %v255 = vmul.f32 %v208, %v218
        %v256 = vmul.f32 %v212, %v218
        %v257 = vmul.f32 %v208, %v223
        %v258 = vmul.f32 %v212, %v223
        %v259 = vmul.f32 %v208, %v228
        %v260 = vmul.f32 %v212, %v228
        %v261 = vmul.f32 %v208, %v233
        %v262 = vmul.f32 %v212, %v233
        %v263 = vmul.f32 %v208, %v238
        %v264 = vmul.f32 %v212, %v238
        %v265 = vmul.f32 %v208, %v243
        %v266 = vmul.f32 %v212, %v243
        %v267 = vmul.f32 %v208, %v248
        %v268 = vmul.f32 %v212, %v248
        %v269 = vmul.f32 %v208, %v253
        %v270 = vmul.f32 %v212, %v253
        %271 = vset.pattern.permute.xlu0 1
        %272 = vperm.xlu0 %271, %v196
        %v273 = vpop.permute.xlu0 %272
        %275 = vset.pattern.permute.xlu0 1
        %276 = vperm.xlu0 %275, %v197
        %v277 = vpop.permute.xlu0 %276
        %279 = vset.pattern.permute.xlu0 1
        %280 = vperm.xlu0 %279, %v198
        %v281 = vpop.permute.xlu0 %280
        %283 = vset.pattern.permute.xlu0 1
        %284 = vperm.xlu0 %283, %v199
        %v285 = vpop.permute.xlu0 %284
        %287 = vset.pattern.permute.xlu0 1
        %288 = vperm.xlu0 %287, %v200
        %v289 = vpop.permute.xlu0 %288
        %291 = vset.pattern.permute.xlu0 1
        %292 = vperm.xlu0 %291, %v201
        %v293 = vpop.permute.xlu0 %292
        %295 = vset.pattern.permute.xlu0 1
        %296 = vperm.xlu0 %295, %v202
        %v297 = vpop.permute.xlu0 %296
        %299 = vset.pattern.permute.xlu0 1
        %300 = vperm.xlu0 %299, %v203
        %v301 = vpop.permute.xlu0 %300
        %v303 = vadd.f32 %v255, %v273
        %v304 = vadd.f32 %v256, %v273
        %v305 = vadd.f32 %v257, %v277
        %v306 = vadd.f32 %v258, %v277
        %v307 = vadd.f32 %v259, %v281
        %v308 = vadd.f32 %v260, %v281
        %v309 = vadd.f32 %v261, %v285
        %v310 = vadd.f32 %v262, %v285
        %v311 = vadd.f32 %v263, %v289
        %v312 = vadd.f32 %v264, %v289
        %v313 = vadd.f32 %v265, %v293
        %v314 = vadd.f32 %v266, %v293
        %v315 = vadd.f32 %v267, %v297
        %v316 = vadd.f32 %v268, %v297
        %v317 = vadd.f32 %v269, %v301
        %v318 = vadd.f32 %v270, %v301
        %v319 = vand.u32 2147483647, %v303
        %vm320 = vcmp.le.f32.partialorder %v319, 0.7853982
        %vm321 = vcmp.lt.s32.totalorder %v303, 0
        %v322 = vand.u32 %v303, 2139095040
        %v323 = vshrl.u32 %v322, 23
        %v324 = vsub.s32 %v323, 127
        %v325 = vand.u32 2147483647, %v303
        %v326 = vand.u32 %v325, 8388607
        %v327 = vor.u32 %v326, 8388608
        %v328 = vsub.s32 0, %v327
        %v329 = vadd.s32 %v324, 1
        %vm330 = vcmp.gt.s32.totalorder %v329, 0
        %v331 = vsel %vm330, %v329, 0
        %v332 = vshrl.u32 %v331, 5
        %v333 = vand.u32 %v331, 31
        %v334 = vsub.s32 32, %v333
        %v335 = vshrl.u32 683565275, %v334
        %v336 = vshll.u32 683565275, %v333
        %v337 = vshrl.u32 2475754826, %v334
        %v338 = vor.u32 %v336, %v337
        %v339 = vshll.u32 2475754826, %v333
        %v340 = vshrl.u32 2131351028, %v334
        %v341 = vor.u32 %v339, %v340
        %v342 = vshll.u32 2131351028, %v333
        %v343 = vshrl.u32 2102212464, %v334
        %v344 = vor.u32 %v342, %v343
        %v345 = vshll.u32 2102212464, %v333
        %v346 = vshrl.u32 920167782, %v334
        %v347 = vor.u32 %v345, %v346
        %v348 = vshll.u32 920167782, %v333
        %v349 = vshrl.u32 1326507024, %v334
        %v350 = vor.u32 %v348, %v349
        %vm351 = vcmp.lt.s32.totalorder %v332, 1
        %vm352 = vcmp.lt.s32.totalorder %v332, 2
        %vm353 = vcmp.lt.s32.totalorder %v332, 3
        %vm354 = vcmp.lt.s32.totalorder %v332, 4
        %v355 = vsel %vm351, %v335, %v338
        %v356 = vsel %vm354, %v344, 2102212464
        %v357 = vsel %vm353, %v341, %v356
        %v358 = vsel %vm352, %v355, %v357
        %v359 = vsel %vm351, %v338, %v341
        %v360 = vsel %vm354, %v347, 920167782
        %v361 = vsel %vm353, %v344, %v360
        %v362 = vsel %vm352, %v359, %v361
        %v363 = vsel %vm351, %v341, %v344
        %v364 = vsel %vm354, %v350, 1326507024
        %v365 = vsel %vm353, %v347, %v364
        %v366 = vsel %vm352, %v363, %v365
        %v367 = vshll.u32 %v327, 8
        %v368 = vmul.u32.u64.compose %v367, %v366
        %v369 = vextract.low.u32 %v368
        %v370 = vextract.high.u32 %v368
        %v371 = vmul.u32.u64.compose %v367, %v362
        %v372 = vextract.low.u32 %v371
        %v373 = vextract.high.u32 %v371
        %v374 = vmul.u32 %v367, %v358
        %v375 = vadd.s32 %v370, %v372
        %vm376 = vc.u32 %v370, %v372
        %v377 = vadd.s32 %v373, 1
        %v378 = vsel %vm376, %v377, %v373
        %v379 = vadd.s32 %v374, %v378
        %v380 = vadd.s32 %v379, 536870912
        %v381 = vshrl.u32 %v380, 30
        %v382 = vshll.u32 %v381, 30
        %v383 = vsub.s32 %v379, %v382
        %vm384 = vcmp.lt.s32.totalorder %v383, 0
        %v385 = vsub.s32 0, %v383
        %v386 = vsel %vm384, %v385, %v383
        %v387 = vclz %v386
        %v388 = vsub.s32 %v387, 2
        %vm389 = vcmp.gt.s32.totalorder 0, %v388
        %v390 = vsel %vm389, 0, %v388
        %v391 = vsub.s32 32, %v390
        %v392 = vshll.u32 %v383, %v390
        %v393 = vshrl.u32 %v375, %v391
        %v394 = vor.u32 %v392, %v393
        %v395 = vsub.s32 4294967266, %v390
        %v396 = vadd.s32 %v395, 127
        %v397 = vshll.u32 %v396, 23
        %v398 = vor.u32 4788187, %v397
        %v399 = vand.u32 2147483647, %v398
        %v401 = vcvt.s32.f32 %v394
        %v402 = vmul.f32 %v401, %v399
        %v403 = vxor.u32 %v402, 2147483648
        %v404 = vsel %vm321, %v403, %v402
        %v405 = vsub.s32 4, %v381
        %v406 = vsel %vm321, %v405, %v381
        %v407 = vsel %vm320, %v303, %v404
        %v408 = vsel %vm320, 0, %v406
        %v409 = vcosq.f32.pop %v407
        %v410 = vsinq.f32.pop %v407
        %vm411 = vweird.f32 %v303
        %v412 = vadd.s32 %v408, 3
        %v413 = vand.u32 %v412, 3
        %vm414 = vcmp.lt.s32.totalorder %v413, 2
        %vm415 = vcmp.eq.s32.totalorder %v413, 0
        %v416 = vxor.u32 %v410, 2147483648
        %v417 = vsel %vm415, %v409, %v416
        %vm418 = vcmp.eq.s32.totalorder %v413, 2
        %v419 = vxor.u32 %v409, 2147483648
        %v420 = vsel %vm418, %v419, %v410
        %v421 = vsel %vm414, %v417, %v420
        %v422 = vsel %vm411, nan, %v421
        %v423 = vand.u32 2147483647, %v304
        %vm424 = vcmp.le.f32.partialorder %v423, 0.7853982
        %vm425 = vcmp.lt.s32.totalorder %v304, 0
        %v426 = vand.u32 %v304, 2139095040
        %v427 = vshrl.u32 %v426, 23
        %v428 = vsub.s32 %v427, 127
        %v429 = vand.u32 2147483647, %v304
        %v430 = vand.u32 %v429, 8388607
        %v431 = vor.u32 %v430, 8388608
        %v432 = vsub.s32 0, %v431
        %v433 = vadd.s32 %v428, 1
        %vm434 = vcmp.gt.s32.totalorder %v433, 0
        %v435 = vsel %vm434, %v433, 0
        %v436 = vshrl.u32 %v435, 5
        %v437 = vand.u32 %v435, 31
        %v438 = vsub.s32 32, %v437
        %v439 = vshrl.u32 683565275, %v438
        %v440 = vshll.u32 683565275, %v437
        %v441 = vshrl.u32 2475754826, %v438
        %v442 = vor.u32 %v440, %v441
        %v443 = vshll.u32 2475754826, %v437
        %v444 = vshrl.u32 2131351028, %v438
        %v445 = vor.u32 %v443, %v444
        %v446 = vshll.u32 2131351028, %v437
        %v447 = vshrl.u32 2102212464, %v438
        %v448 = vor.u32 %v446, %v447
        %v449 = vshll.u32 2102212464, %v437
        %v450 = vshrl.u32 920167782, %v438
        %v451 = vor.u32 %v449, %v450
        %v452 = vshll.u32 920167782, %v437
        %v453 = vshrl.u32 1326507024, %v438
        %v454 = vor.u32 %v452, %v453
        %vm455 = vcmp.lt.s32.totalorder %v436, 1
        %vm456 = vcmp.lt.s32.totalorder %v436, 2
        %vm457 = vcmp.lt.s32.totalorder %v436, 3
        %vm458 = vcmp.lt.s32.totalorder %v436, 4
        %v459 = vsel %vm455, %v439, %v442
        %v460 = vsel %vm458, %v448, 2102212464
        %v461 = vsel %vm457, %v445, %v460
        %v462 = vsel %vm456, %v459, %v461
        %v463 = vsel %vm455, %v442, %v445
        %v464 = vsel %vm458, %v451, 920167782
        %v465 = vsel %vm457, %v448, %v464
        %v466 = vsel %vm456, %v463, %v465
        %v467 = vsel %vm455, %v445, %v448
        %v468 = vsel %vm458, %v454, 1326507024
        %v469 = vsel %vm457, %v451, %v468
        %v470 = vsel %vm456, %v467, %v469
        %v471 = vshll.u32 %v431, 8
        %v472 = vmul.u32.u64.compose %v471, %v470
        %v473 = vextract.low.u32 %v472
        %v474 = vextract.high.u32 %v472
        %v475 = vmul.u32.u64.compose %v471, %v466
        %v476 = vextract.low.u32 %v475
        %v477 = vextract.high.u32 %v475
        %v478 = vmul.u32 %v471, %v462
        %v479 = vadd.s32 %v474, %v476
        %vm480 = vc.u32 %v474, %v476
        %v481 = vadd.s32 %v477, 1
        %v482 = vsel %vm480, %v481, %v477
        %v483 = vadd.s32 %v478, %v482
        %v484 = vadd.s32 %v483, 536870912
        %v485 = vshrl.u32 %v484, 30
        %v486 = vshll.u32 %v485, 30
        %v487 = vsub.s32 %v483, %v486
        %vm488 = vcmp.lt.s32.totalorder %v487, 0
        %v489 = vsub.s32 0, %v487
        %v490 = vsel %vm488, %v489, %v487
        %v491 = vclz %v490
        %v492 = vsub.s32 %v491, 2
        %vm493 = vcmp.gt.s32.totalorder 0, %v492
        %v494 = vsel %vm493, 0, %v492
        %v495 = vsub.s32 32, %v494
        %v496 = vshll.u32 %v487, %v494
        %v497 = vshrl.u32 %v479, %v495
        %v498 = vor.u32 %v496, %v497
        %v499 = vsub.s32 4294967266, %v494
        %v500 = vadd.s32 %v499, 127
        %v501 = vshll.u32 %v500, 23
        %v502 = vor.u32 4788187, %v501
        %v503 = vand.u32 2147483647, %v502
        %v505 = vcvt.s32.f32 %v498
        %v506 = vmul.f32 %v505, %v503
        %v507 = vxor.u32 %v506, 2147483648
        %v508 = vsel %vm425, %v507, %v506
        %v509 = vsub.s32 4, %v485
        %v510 = vsel %vm425, %v509, %v485
        %v511 = vsel %vm424, %v304, %v508
        %v512 = vsel %vm424, 0, %v510
        %v513 = vcosq.f32.pop %v511
        %v514 = vsinq.f32.pop %v511
        %vm515 = vweird.f32 %v304
        %v516 = vadd.s32 %v512, 3
        %v517 = vand.u32 %v516, 3
        %vm518 = vcmp.lt.s32.totalorder %v517, 2
        %vm519 = vcmp.eq.s32.totalorder %v517, 0
        %v520 = vxor.u32 %v514, 2147483648
        %v521 = vsel %vm519, %v513, %v520
        %vm522 = vcmp.eq.s32.totalorder %v517, 2
        %v523 = vxor.u32 %v513, 2147483648
        %v524 = vsel %vm522, %v523, %v514
        %v525 = vsel %vm518, %v521, %v524
        %v526 = vsel %vm515, nan, %v525
        %v527 = vand.u32 2147483647, %v305
        %vm528 = vcmp.le.f32.partialorder %v527, 0.7853982
        %vm529 = vcmp.lt.s32.totalorder %v305, 0
        %v530 = vand.u32 %v305, 2139095040
        %v531 = vshrl.u32 %v530, 23
        %v532 = vsub.s32 %v531, 127
        %v533 = vand.u32 2147483647, %v305
        %v534 = vand.u32 %v533, 8388607
        %v535 = vor.u32 %v534, 8388608
        %v536 = vsub.s32 0, %v535
        %v537 = vadd.s32 %v532, 1
        %vm538 = vcmp.gt.s32.totalorder %v537, 0
        %v539 = vsel %vm538, %v537, 0
        %v540 = vshrl.u32 %v539, 5
        %v541 = vand.u32 %v539, 31
        %v542 = vsub.s32 32, %v541
        %v543 = vshrl.u32 683565275, %v542
        %v544 = vshll.u32 683565275, %v541
        %v545 = vshrl.u32 2475754826, %v542
        %v546 = vor.u32 %v544, %v545
        %v547 = vshll.u32 2475754826, %v541
        %v548 = vshrl.u32 2131351028, %v542
        %v549 = vor.u32 %v547, %v548
        %v550 = vshll.u32 2131351028, %v541
        %v551 = vshrl.u32 2102212464, %v542
        %v552 = vor.u32 %v550, %v551
        %v553 = vshll.u32 2102212464, %v541
        %v554 = vshrl.u32 920167782, %v542
        %v555 = vor.u32 %v553, %v554
        %v556 = vshll.u32 920167782, %v541
        %v557 = vshrl.u32 1326507024, %v542
        %v558 = vor.u32 %v556, %v557
        %vm559 = vcmp.lt.s32.totalorder %v540, 1
        %vm560 = vcmp.lt.s32.totalorder %v540, 2
        %vm561 = vcmp.lt.s32.totalorder %v540, 3
        %vm562 = vcmp.lt.s32.totalorder %v540, 4
        %v563 = vsel %vm559, %v543, %v546
        %v564 = vsel %vm562, %v552, 2102212464
        %v565 = vsel %vm561, %v549, %v564
        %v566 = vsel %vm560, %v563, %v565
        %v567 = vsel %vm559, %v546, %v549
        %v568 = vsel %vm562, %v555, 920167782
        %v569 = vsel %vm561, %v552, %v568
        %v570 = vsel %vm560, %v567, %v569
        %v571 = vsel %vm559, %v549, %v552
        %v572 = vsel %vm562, %v558, 1326507024
        %v573 = vsel %vm561, %v555, %v572
        %v574 = vsel %vm560, %v571, %v573
        %v575 = vshll.u32 %v535, 8
        %v576 = vmul.u32.u64.compose %v575, %v574
        %v577 = vextract.low.u32 %v576
        %v578 = vextract.high.u32 %v576
        %v579 = vmul.u32.u64.compose %v575, %v570
        %v580 = vextract.low.u32 %v579
        %v581 = vextract.high.u32 %v579
        %v582 = vmul.u32 %v575, %v566
        %v583 = vadd.s32 %v578, %v580
        %vm584 = vc.u32 %v578, %v580
        %v585 = vadd.s32 %v581, 1
        %v586 = vsel %vm584, %v585, %v581
        %v587 = vadd.s32 %v582, %v586
        %v588 = vadd.s32 %v587, 536870912
        %v589 = vshrl.u32 %v588, 30
        %v590 = vshll.u32 %v589, 30
        %v591 = vsub.s32 %v587, %v590
        %vm592 = vcmp.lt.s32.totalorder %v591, 0
        %v593 = vsub.s32 0, %v591
        %v594 = vsel %vm592, %v593, %v591
        %v595 = vclz %v594
        %v596 = vsub.s32 %v595, 2
        %vm597 = vcmp.gt.s32.totalorder 0, %v596
        %v598 = vsel %vm597, 0, %v596
        %v599 = vsub.s32 32, %v598
        %v600 = vshll.u32 %v591, %v598
        %v601 = vshrl.u32 %v583, %v599
        %v602 = vor.u32 %v600, %v601
        %v603 = vsub.s32 4294967266, %v598
        %v604 = vadd.s32 %v603, 127
        %v605 = vshll.u32 %v604, 23
        %v606 = vor.u32 4788187, %v605
        %v607 = vand.u32 2147483647, %v606
        %v609 = vcvt.s32.f32 %v602
        %v610 = vmul.f32 %v609, %v607
        %v611 = vxor.u32 %v610, 2147483648
        %v612 = vsel %vm529, %v611, %v610
        %v613 = vsub.s32 4, %v589
        %v614 = vsel %vm529, %v613, %v589
        %v615 = vsel %vm528, %v305, %v612
        %v616 = vsel %vm528, 0, %v614
        %v617 = vcosq.f32.pop %v615
        %v618 = vsinq.f32.pop %v615
        %vm619 = vweird.f32 %v305
        %v620 = vadd.s32 %v616, 3
        %v621 = vand.u32 %v620, 3
        %vm622 = vcmp.lt.s32.totalorder %v621, 2
        %vm623 = vcmp.eq.s32.totalorder %v621, 0
        %v624 = vxor.u32 %v618, 2147483648
        %v625 = vsel %vm623, %v617, %v624
        %vm626 = vcmp.eq.s32.totalorder %v621, 2
        %v627 = vxor.u32 %v617, 2147483648
        %v628 = vsel %vm626, %v627, %v618
        %v629 = vsel %vm622, %v625, %v628
        %v630 = vsel %vm619, nan, %v629
        %v631 = vand.u32 2147483647, %v306
        %vm632 = vcmp.le.f32.partialorder %v631, 0.7853982
        %vm633 = vcmp.lt.s32.totalorder %v306, 0
        %v634 = vand.u32 %v306, 2139095040
        %v635 = vshrl.u32 %v634, 23
        %v636 = vsub.s32 %v635, 127
        %v637 = vand.u32 2147483647, %v306
        %v638 = vand.u32 %v637, 8388607
        %v639 = vor.u32 %v638, 8388608
        %v640 = vsub.s32 0, %v639
        %v641 = vadd.s32 %v636, 1
        %vm642 = vcmp.gt.s32.totalorder %v641, 0
        %v643 = vsel %vm642, %v641, 0
        %v644 = vshrl.u32 %v643, 5
        %v645 = vand.u32 %v643, 31
        %v646 = vsub.s32 32, %v645
        %v647 = vshrl.u32 683565275, %v646
        %v648 = vshll.u32 683565275, %v645
        %v649 = vshrl.u32 2475754826, %v646
        %v650 = vor.u32 %v648, %v649
        %v651 = vshll.u32 2475754826, %v645
        %v652 = vshrl.u32 2131351028, %v646
        %v653 = vor.u32 %v651, %v652
        %v654 = vshll.u32 2131351028, %v645
        %v655 = vshrl.u32 2102212464, %v646
        %v656 = vor.u32 %v654, %v655
        %v657 = vshll.u32 2102212464, %v645
        %v658 = vshrl.u32 920167782, %v646
        %v659 = vor.u32 %v657, %v658
        %v660 = vshll.u32 920167782, %v645
        %v661 = vshrl.u32 1326507024, %v646
        %v662 = vor.u32 %v660, %v661
        %vm663 = vcmp.lt.s32.totalorder %v644, 1
        %vm664 = vcmp.lt.s32.totalorder %v644, 2
        %vm665 = vcmp.lt.s32.totalorder %v644, 3
        %vm666 = vcmp.lt.s32.totalorder %v644, 4
        %v667 = vsel %vm663, %v647, %v650
        %v668 = vsel %vm666, %v656, 2102212464
        %v669 = vsel %vm665, %v653, %v668
        %v670 = vsel %vm664, %v667, %v669
        %v671 = vsel %vm663, %v650, %v653
        %v672 = vsel %vm666, %v659, 920167782
        %v673 = vsel %vm665, %v656, %v672
        %v674 = vsel %vm664, %v671, %v673
        %v675 = vsel %vm663, %v653, %v656
        %v676 = vsel %vm666, %v662, 1326507024
        %v677 = vsel %vm665, %v659, %v676
        %v678 = vsel %vm664, %v675, %v677
        %v679 = vshll.u32 %v639, 8
        %v680 = vmul.u32.u64.compose %v679, %v678
        %v681 = vextract.low.u32 %v680
        %v682 = vextract.high.u32 %v680
        %v683 = vmul.u32.u64.compose %v679, %v674
        %v684 = vextract.low.u32 %v683
        %v685 = vextract.high.u32 %v683
        %v686 = vmul.u32 %v679, %v670
        %v687 = vadd.s32 %v682, %v684
        %vm688 = vc.u32 %v682, %v684
        %v689 = vadd.s32 %v685, 1
        %v690 = vsel %vm688, %v689, %v685
        %v691 = vadd.s32 %v686, %v690
        %v692 = vadd.s32 %v691, 536870912
        %v693 = vshrl.u32 %v692, 30
        %v694 = vshll.u32 %v693, 30
        %v695 = vsub.s32 %v691, %v694
        %vm696 = vcmp.lt.s32.totalorder %v695, 0
        %v697 = vsub.s32 0, %v695
        %v698 = vsel %vm696, %v697, %v695
        %v699 = vclz %v698
        %v700 = vsub.s32 %v699, 2
        %vm701 = vcmp.gt.s32.totalorder 0, %v700
        %v702 = vsel %vm701, 0, %v700
        %v703 = vsub.s32 32, %v702
        %v704 = vshll.u32 %v695, %v702
        %v705 = vshrl.u32 %v687, %v703
        %v706 = vor.u32 %v704, %v705
        %v707 = vsub.s32 4294967266, %v702
        %v708 = vadd.s32 %v707, 127
        %v709 = vshll.u32 %v708, 23
        %v710 = vor.u32 4788187, %v709
        %v711 = vand.u32 2147483647, %v710
        %v713 = vcvt.s32.f32 %v706
        %v714 = vmul.f32 %v713, %v711
        %v715 = vxor.u32 %v714, 2147483648
        %v716 = vsel %vm633, %v715, %v714
        %v717 = vsub.s32 4, %v693
        %v718 = vsel %vm633, %v717, %v693
        %v719 = vsel %vm632, %v306, %v716
        %v720 = vsel %vm632, 0, %v718
        %v721 = vcosq.f32.pop %v719
        %v722 = vsinq.f32.pop %v719
        %vm723 = vweird.f32 %v306
        %v724 = vadd.s32 %v720, 3
        %v725 = vand.u32 %v724, 3
        %vm726 = vcmp.lt.s32.totalorder %v725, 2
        %vm727 = vcmp.eq.s32.totalorder %v725, 0
        %v728 = vxor.u32 %v722, 2147483648
        %v729 = vsel %vm727, %v721, %v728
        %vm730 = vcmp.eq.s32.totalorder %v725, 2
        %v731 = vxor.u32 %v721, 2147483648
        %v732 = vsel %vm730, %v731, %v722
        %v733 = vsel %vm726, %v729, %v732
        %v734 = vsel %vm723, nan, %v733
        %v735 = vand.u32 2147483647, %v307
        %vm736 = vcmp.le.f32.partialorder %v735, 0.7853982
        %vm737 = vcmp.lt.s32.totalorder %v307, 0
        %v738 = vand.u32 %v307, 2139095040
        %v739 = vshrl.u32 %v738, 23
        %v740 = vsub.s32 %v739, 127
        %v741 = vand.u32 2147483647, %v307
        %v742 = vand.u32 %v741, 8388607
        %v743 = vor.u32 %v742, 8388608
        %v744 = vsub.s32 0, %v743
        %v745 = vadd.s32 %v740, 1
        %vm746 = vcmp.gt.s32.totalorder %v745, 0
        %v747 = vsel %vm746, %v745, 0
        %v748 = vshrl.u32 %v747, 5
        %v749 = vand.u32 %v747, 31
        %v750 = vsub.s32 32, %v749
        %v751 = vshrl.u32 683565275, %v750
        %v752 = vshll.u32 683565275, %v749
        %v753 = vshrl.u32 2475754826, %v750
        %v754 = vor.u32 %v752, %v753
        %v755 = vshll.u32 2475754826, %v749
        %v756 = vshrl.u32 2131351028, %v750
        %v757 = vor.u32 %v755, %v756
        %v758 = vshll.u32 2131351028, %v749
        %v759 = vshrl.u32 2102212464, %v750
        %v760 = vor.u32 %v758, %v759
        %v761 = vshll.u32 2102212464, %v749
        %v762 = vshrl.u32 920167782, %v750
        %v763 = vor.u32 %v761, %v762
        %v764 = vshll.u32 920167782, %v749
        %v765 = vshrl.u32 1326507024, %v750
        %v766 = vor.u32 %v764, %v765
        %vm767 = vcmp.lt.s32.totalorder %v748, 1
        %vm768 = vcmp.lt.s32.totalorder %v748, 2
        %vm769 = vcmp.lt.s32.totalorder %v748, 3
        %vm770 = vcmp.lt.s32.totalorder %v748, 4
        %v771 = vsel %vm767, %v751, %v754
        %v772 = vsel %vm770, %v760, 2102212464
        %v773 = vsel %vm769, %v757, %v772
        %v774 = vsel %vm768, %v771, %v773
        %v775 = vsel %vm767, %v754, %v757
        %v776 = vsel %vm770, %v763, 920167782
        %v777 = vsel %vm769, %v760, %v776
        %v778 = vsel %vm768, %v775, %v777
        %v779 = vsel %vm767, %v757, %v760
        %v780 = vsel %vm770, %v766, 1326507024
        %v781 = vsel %vm769, %v763, %v780
        %v782 = vsel %vm768, %v779, %v781
        %v783 = vshll.u32 %v743, 8
        %v784 = vmul.u32.u64.compose %v783, %v782
        %v785 = vextract.low.u32 %v784
        %v786 = vextract.high.u32 %v784
        %v787 = vmul.u32.u64.compose %v783, %v778
        %v788 = vextract.low.u32 %v787
        %v789 = vextract.high.u32 %v787
        %v790 = vmul.u32 %v783, %v774
        %v791 = vadd.s32 %v786, %v788
        %vm792 = vc.u32 %v786, %v788
        %v793 = vadd.s32 %v789, 1
        %v794 = vsel %vm792, %v793, %v789
        %v795 = vadd.s32 %v790, %v794
        %v796 = vadd.s32 %v795, 536870912
        %v797 = vshrl.u32 %v796, 30
        %v798 = vshll.u32 %v797, 30
        %v799 = vsub.s32 %v795, %v798
        %vm800 = vcmp.lt.s32.totalorder %v799, 0
        %v801 = vsub.s32 0, %v799
        %v802 = vsel %vm800, %v801, %v799
        %v803 = vclz %v802
        %v804 = vsub.s32 %v803, 2
        %vm805 = vcmp.gt.s32.totalorder 0, %v804
        %v806 = vsel %vm805, 0, %v804
        %v807 = vsub.s32 32, %v806
        %v808 = vshll.u32 %v799, %v806
        %v809 = vshrl.u32 %v791, %v807
        %v810 = vor.u32 %v808, %v809
        %v811 = vsub.s32 4294967266, %v806
        %v812 = vadd.s32 %v811, 127
        %v813 = vshll.u32 %v812, 23
        %v814 = vor.u32 4788187, %v813
        %v815 = vand.u32 2147483647, %v814
        %v817 = vcvt.s32.f32 %v810
        %v818 = vmul.f32 %v817, %v815
        %v819 = vxor.u32 %v818, 2147483648
        %v820 = vsel %vm737, %v819, %v818
        %v821 = vsub.s32 4, %v797
        %v822 = vsel %vm737, %v821, %v797
        %v823 = vsel %vm736, %v307, %v820
        %v824 = vsel %vm736, 0, %v822
        %v825 = vcosq.f32.pop %v823
        %v826 = vsinq.f32.pop %v823
        %vm827 = vweird.f32 %v307
        %v828 = vadd.s32 %v824, 3
        %v829 = vand.u32 %v828, 3
        %vm830 = vcmp.lt.s32.totalorder %v829, 2
        %vm831 = vcmp.eq.s32.totalorder %v829, 0
        %v832 = vxor.u32 %v826, 2147483648
        %v833 = vsel %vm831, %v825, %v832
        %vm834 = vcmp.eq.s32.totalorder %v829, 2
        %v835 = vxor.u32 %v825, 2147483648
        %v836 = vsel %vm834, %v835, %v826
        %v837 = vsel %vm830, %v833, %v836
        %v838 = vsel %vm827, nan, %v837
        %v839 = vand.u32 2147483647, %v308
        %vm840 = vcmp.le.f32.partialorder %v839, 0.7853982
        %vm841 = vcmp.lt.s32.totalorder %v308, 0
        %v842 = vand.u32 %v308, 2139095040
        %v843 = vshrl.u32 %v842, 23
        %v844 = vsub.s32 %v843, 127
        %v845 = vand.u32 2147483647, %v308
        %v846 = vand.u32 %v845, 8388607
        %v847 = vor.u32 %v846, 8388608
        %v848 = vsub.s32 0, %v847
        %v849 = vadd.s32 %v844, 1
        %vm850 = vcmp.gt.s32.totalorder %v849, 0
        %v851 = vsel %vm850, %v849, 0
        %v852 = vshrl.u32 %v851, 5
        %v853 = vand.u32 %v851, 31
        %v854 = vsub.s32 32, %v853
        %v855 = vshrl.u32 683565275, %v854
        %v856 = vshll.u32 683565275, %v853
        %v857 = vshrl.u32 2475754826, %v854
        %v858 = vor.u32 %v856, %v857
        %v859 = vshll.u32 2475754826, %v853
        %v860 = vshrl.u32 2131351028, %v854
        %v861 = vor.u32 %v859, %v860
        %v862 = vshll.u32 2131351028, %v853
        %v863 = vshrl.u32 2102212464, %v854
        %v864 = vor.u32 %v862, %v863
        %v865 = vshll.u32 2102212464, %v853
        %v866 = vshrl.u32 920167782, %v854
        %v867 = vor.u32 %v865, %v866
        %v868 = vshll.u32 920167782, %v853
        %v869 = vshrl.u32 1326507024, %v854
        %v870 = vor.u32 %v868, %v869
        %vm871 = vcmp.lt.s32.totalorder %v852, 1
        %vm872 = vcmp.lt.s32.totalorder %v852, 2
        %vm873 = vcmp.lt.s32.totalorder %v852, 3
        %vm874 = vcmp.lt.s32.totalorder %v852, 4
        %v875 = vsel %vm871, %v855, %v858
        %v876 = vsel %vm874, %v864, 2102212464
        %v877 = vsel %vm873, %v861, %v876
        %v878 = vsel %vm872, %v875, %v877
        %v879 = vsel %vm871, %v858, %v861
        %v880 = vsel %vm874, %v867, 920167782
        %v881 = vsel %vm873, %v864, %v880
        %v882 = vsel %vm872, %v879, %v881
        %v883 = vsel %vm871, %v861, %v864
        %v884 = vsel %vm874, %v870, 1326507024
        %v885 = vsel %vm873, %v867, %v884
        %v886 = vsel %vm872, %v883, %v885
        %v887 = vshll.u32 %v847, 8
        %v888 = vmul.u32.u64.compose %v887, %v886
        %v889 = vextract.low.u32 %v888
        %v890 = vextract.high.u32 %v888
        %v891 = vmul.u32.u64.compose %v887, %v882
        %v892 = vextract.low.u32 %v891
        %v893 = vextract.high.u32 %v891
        %v894 = vmul.u32 %v887, %v878
        %v895 = vadd.s32 %v890, %v892
        %vm896 = vc.u32 %v890, %v892
        %v897 = vadd.s32 %v893, 1
        %v898 = vsel %vm896, %v897, %v893
        %v899 = vadd.s32 %v894, %v898
        %v900 = vadd.s32 %v899, 536870912
        %v901 = vshrl.u32 %v900, 30
        %v902 = vshll.u32 %v901, 30
        %v903 = vsub.s32 %v899, %v902
        %vm904 = vcmp.lt.s32.totalorder %v903, 0
        %v905 = vsub.s32 0, %v903
        %v906 = vsel %vm904, %v905, %v903
        %v907 = vclz %v906
        %v908 = vsub.s32 %v907, 2
        %vm909 = vcmp.gt.s32.totalorder 0, %v908
        %v910 = vsel %vm909, 0, %v908
        %v911 = vsub.s32 32, %v910
        %v912 = vshll.u32 %v903, %v910
        %v913 = vshrl.u32 %v895, %v911
        %v914 = vor.u32 %v912, %v913
        %v915 = vsub.s32 4294967266, %v910
        %v916 = vadd.s32 %v915, 127
        %v917 = vshll.u32 %v916, 23
        %v918 = vor.u32 4788187, %v917
        %v919 = vand.u32 2147483647, %v918
        %v921 = vcvt.s32.f32 %v914
        %v922 = vmul.f32 %v921, %v919
        %v923 = vxor.u32 %v922, 2147483648
        %v924 = vsel %vm841, %v923, %v922
        %v925 = vsub.s32 4, %v901
        %v926 = vsel %vm841, %v925, %v901
        %v927 = vsel %vm840, %v308, %v924
        %v928 = vsel %vm840, 0, %v926
        %v929 = vcosq.f32.pop %v927
        %v930 = vsinq.f32.pop %v927
        %vm931 = vweird.f32 %v308
        %v932 = vadd.s32 %v928, 3
        %v933 = vand.u32 %v932, 3
        %vm934 = vcmp.lt.s32.totalorder %v933, 2
        %vm935 = vcmp.eq.s32.totalorder %v933, 0
        %v936 = vxor.u32 %v930, 2147483648
        %v937 = vsel %vm935, %v929, %v936
        %vm938 = vcmp.eq.s32.totalorder %v933, 2
        %v939 = vxor.u32 %v929, 2147483648
        %v940 = vsel %vm938, %v939, %v930
        %v941 = vsel %vm934, %v937, %v940
        %v942 = vsel %vm931, nan, %v941
        %v943 = vand.u32 2147483647, %v309
        %vm944 = vcmp.le.f32.partialorder %v943, 0.7853982
        %vm945 = vcmp.lt.s32.totalorder %v309, 0
        %v946 = vand.u32 %v309, 2139095040
        %v947 = vshrl.u32 %v946, 23
        %v948 = vsub.s32 %v947, 127
        %v949 = vand.u32 2147483647, %v309
        %v950 = vand.u32 %v949, 8388607
        %v951 = vor.u32 %v950, 8388608
        %v952 = vsub.s32 0, %v951
        %v953 = vadd.s32 %v948, 1
        %vm954 = vcmp.gt.s32.totalorder %v953, 0
        %v955 = vsel %vm954, %v953, 0
        %v956 = vshrl.u32 %v955, 5
        %v957 = vand.u32 %v955, 31
        %v958 = vsub.s32 32, %v957
        %v959 = vshrl.u32 683565275, %v958
        %v960 = vshll.u32 683565275, %v957
        %v961 = vshrl.u32 2475754826, %v958
        %v962 = vor.u32 %v960, %v961
        %v963 = vshll.u32 2475754826, %v957
        %v964 = vshrl.u32 2131351028, %v958
        %v965 = vor.u32 %v963, %v964
        %v966 = vshll.u32 2131351028, %v957
        %v967 = vshrl.u32 2102212464, %v958
        %v968 = vor.u32 %v966, %v967
        %v969 = vshll.u32 2102212464, %v957
        %v970 = vshrl.u32 920167782, %v958
        %v971 = vor.u32 %v969, %v970
        %v972 = vshll.u32 920167782, %v957
        %v973 = vshrl.u32 1326507024, %v958
        %v974 = vor.u32 %v972, %v973
        %vm975 = vcmp.lt.s32.totalorder %v956, 1
        %vm976 = vcmp.lt.s32.totalorder %v956, 2
        %vm977 = vcmp.lt.s32.totalorder %v956, 3
        %vm978 = vcmp.lt.s32.totalorder %v956, 4
        %v979 = vsel %vm975, %v959, %v962
        %v980 = vsel %vm978, %v968, 2102212464
        %v981 = vsel %vm977, %v965, %v980
        %v982 = vsel %vm976, %v979, %v981
        %v983 = vsel %vm975, %v962, %v965
        %v984 = vsel %vm978, %v971, 920167782
        %v985 = vsel %vm977, %v968, %v984
        %v986 = vsel %vm976, %v983, %v985
        %v987 = vsel %vm975, %v965, %v968
        %v988 = vsel %vm978, %v974, 1326507024
        %v989 = vsel %vm977, %v971, %v988
        %v990 = vsel %vm976, %v987, %v989
        %v991 = vshll.u32 %v951, 8
        %v992 = vmul.u32.u64.compose %v991, %v990
        %v993 = vextract.low.u32 %v992
        %v994 = vextract.high.u32 %v992
        %v995 = vmul.u32.u64.compose %v991, %v986
        %v996 = vextract.low.u32 %v995
        %v997 = vextract.high.u32 %v995
        %v998 = vmul.u32 %v991, %v982
        %v999 = vadd.s32 %v994, %v996
        %vm1000 = vc.u32 %v994, %v996
        %v1001 = vadd.s32 %v997, 1
        %v1002 = vsel %vm1000, %v1001, %v997
        %v1003 = vadd.s32 %v998, %v1002
        %v1004 = vadd.s32 %v1003, 536870912
        %v1005 = vshrl.u32 %v1004, 30
        %v1006 = vshll.u32 %v1005, 30
        %v1007 = vsub.s32 %v1003, %v1006
        %vm1008 = vcmp.lt.s32.totalorder %v1007, 0
        %v1009 = vsub.s32 0, %v1007
        %v1010 = vsel %vm1008, %v1009, %v1007
        %v1011 = vclz %v1010
        %v1012 = vsub.s32 %v1011, 2
        %vm1013 = vcmp.gt.s32.totalorder 0, %v1012
        %v1014 = vsel %vm1013, 0, %v1012
        %v1015 = vsub.s32 32, %v1014
        %v1016 = vshll.u32 %v1007, %v1014
        %v1017 = vshrl.u32 %v999, %v1015
        %v1018 = vor.u32 %v1016, %v1017
        %v1019 = vsub.s32 4294967266, %v1014
        %v1020 = vadd.s32 %v1019, 127
        %v1021 = vshll.u32 %v1020, 23
        %v1022 = vor.u32 4788187, %v1021
        %v1023 = vand.u32 2147483647, %v1022
        %v1025 = vcvt.s32.f32 %v1018
        %v1026 = vmul.f32 %v1025, %v1023
        %v1027 = vxor.u32 %v1026, 2147483648
        %v1028 = vsel %vm945, %v1027, %v1026
        %v1029 = vsub.s32 4, %v1005
        %v1030 = vsel %vm945, %v1029, %v1005
        %v1031 = vsel %vm944, %v309, %v1028
        %v1032 = vsel %vm944, 0, %v1030
        %v1033 = vcosq.f32.pop %v1031
        %v1034 = vsinq.f32.pop %v1031
        %vm1035 = vweird.f32 %v309
        %v1036 = vadd.s32 %v1032, 3
        %v1037 = vand.u32 %v1036, 3
        %vm1038 = vcmp.lt.s32.totalorder %v1037, 2
        %vm1039 = vcmp.eq.s32.totalorder %v1037, 0
        %v1040 = vxor.u32 %v1034, 2147483648
        %v1041 = vsel %vm1039, %v1033, %v1040
        %vm1042 = vcmp.eq.s32.totalorder %v1037, 2
        %v1043 = vxor.u32 %v1033, 2147483648
        %v1044 = vsel %vm1042, %v1043, %v1034
        %v1045 = vsel %vm1038, %v1041, %v1044
        %v1046 = vsel %vm1035, nan, %v1045
        %v1047 = vand.u32 2147483647, %v310
        %vm1048 = vcmp.le.f32.partialorder %v1047, 0.7853982
        %vm1049 = vcmp.lt.s32.totalorder %v310, 0
        %v1050 = vand.u32 %v310, 2139095040
        %v1051 = vshrl.u32 %v1050, 23
        %v1052 = vsub.s32 %v1051, 127
        %v1053 = vand.u32 2147483647, %v310
        %v1054 = vand.u32 %v1053, 8388607
        %v1055 = vor.u32 %v1054, 8388608
        %v1056 = vsub.s32 0, %v1055
        %v1057 = vadd.s32 %v1052, 1
        %vm1058 = vcmp.gt.s32.totalorder %v1057, 0
        %v1059 = vsel %vm1058, %v1057, 0
        %v1060 = vshrl.u32 %v1059, 5
        %v1061 = vand.u32 %v1059, 31
        %v1062 = vsub.s32 32, %v1061
        %v1063 = vshrl.u32 683565275, %v1062
        %v1064 = vshll.u32 683565275, %v1061
        %v1065 = vshrl.u32 2475754826, %v1062
        %v1066 = vor.u32 %v1064, %v1065
        %v1067 = vshll.u32 2475754826, %v1061
        %v1068 = vshrl.u32 2131351028, %v1062
        %v1069 = vor.u32 %v1067, %v1068
        %v1070 = vshll.u32 2131351028, %v1061
        %v1071 = vshrl.u32 2102212464, %v1062
        %v1072 = vor.u32 %v1070, %v1071
        %v1073 = vshll.u32 2102212464, %v1061
        %v1074 = vshrl.u32 920167782, %v1062
        %v1075 = vor.u32 %v1073, %v1074
        %v1076 = vshll.u32 920167782, %v1061
        %v1077 = vshrl.u32 1326507024, %v1062
        %v1078 = vor.u32 %v1076, %v1077
        %vm1079 = vcmp.lt.s32.totalorder %v1060, 1
        %vm1080 = vcmp.lt.s32.totalorder %v1060, 2
        %vm1081 = vcmp.lt.s32.totalorder %v1060, 3
        %vm1082 = vcmp.lt.s32.totalorder %v1060, 4
        %v1083 = vsel %vm1079, %v1063, %v1066
        %v1084 = vsel %vm1082, %v1072, 2102212464
        %v1085 = vsel %vm1081, %v1069, %v1084
        %v1086 = vsel %vm1080, %v1083, %v1085
        %v1087 = vsel %vm1079, %v1066, %v1069
        %v1088 = vsel %vm1082, %v1075, 920167782
        %v1089 = vsel %vm1081, %v1072, %v1088
        %v1090 = vsel %vm1080, %v1087, %v1089
        %v1091 = vsel %vm1079, %v1069, %v1072
        %v1092 = vsel %vm1082, %v1078, 1326507024
        %v1093 = vsel %vm1081, %v1075, %v1092
        %v1094 = vsel %vm1080, %v1091, %v1093
        %v1095 = vshll.u32 %v1055, 8
        %v1096 = vmul.u32.u64.compose %v1095, %v1094
        %v1097 = vextract.low.u32 %v1096
        %v1098 = vextract.high.u32 %v1096
        %v1099 = vmul.u32.u64.compose %v1095, %v1090
        %v1100 = vextract.low.u32 %v1099
        %v1101 = vextract.high.u32 %v1099
        %v1102 = vmul.u32 %v1095, %v1086
        %v1103 = vadd.s32 %v1098, %v1100
        %vm1104 = vc.u32 %v1098, %v1100
        %v1105 = vadd.s32 %v1101, 1
        %v1106 = vsel %vm1104, %v1105, %v1101
        %v1107 = vadd.s32 %v1102, %v1106
        %v1108 = vadd.s32 %v1107, 536870912
        %v1109 = vshrl.u32 %v1108, 30
        %v1110 = vshll.u32 %v1109, 30
        %v1111 = vsub.s32 %v1107, %v1110
        %vm1112 = vcmp.lt.s32.totalorder %v1111, 0
        %v1113 = vsub.s32 0, %v1111
        %v1114 = vsel %vm1112, %v1113, %v1111
        %v1115 = vclz %v1114
        %v1116 = vsub.s32 %v1115, 2
        %vm1117 = vcmp.gt.s32.totalorder 0, %v1116
        %v1118 = vsel %vm1117, 0, %v1116
        %v1119 = vsub.s32 32, %v1118
        %v1120 = vshll.u32 %v1111, %v1118
        %v1121 = vshrl.u32 %v1103, %v1119
        %v1122 = vor.u32 %v1120, %v1121
        %v1123 = vsub.s32 4294967266, %v1118
        %v1124 = vadd.s32 %v1123, 127
        %v1125 = vshll.u32 %v1124, 23
        %v1126 = vor.u32 4788187, %v1125
        %v1127 = vand.u32 2147483647, %v1126
        %v1129 = vcvt.s32.f32 %v1122
        %v1130 = vmul.f32 %v1129, %v1127
        %v1131 = vxor.u32 %v1130, 2147483648
        %v1132 = vsel %vm1049, %v1131, %v1130
        %v1133 = vsub.s32 4, %v1109
        %v1134 = vsel %vm1049, %v1133, %v1109
        %v1135 = vsel %vm1048, %v310, %v1132
        %v1136 = vsel %vm1048, 0, %v1134
        %v1137 = vcosq.f32.pop %v1135
        %v1138 = vsinq.f32.pop %v1135
        %vm1139 = vweird.f32 %v310
        %v1140 = vadd.s32 %v1136, 3
        %v1141 = vand.u32 %v1140, 3
        %vm1142 = vcmp.lt.s32.totalorder %v1141, 2
        %vm1143 = vcmp.eq.s32.totalorder %v1141, 0
        %v1144 = vxor.u32 %v1138, 2147483648
        %v1145 = vsel %vm1143, %v1137, %v1144
        %vm1146 = vcmp.eq.s32.totalorder %v1141, 2
        %v1147 = vxor.u32 %v1137, 2147483648
        %v1148 = vsel %vm1146, %v1147, %v1138
        %v1149 = vsel %vm1142, %v1145, %v1148
        %v1150 = vsel %vm1139, nan, %v1149
        %v1151 = vand.u32 2147483647, %v311
        %vm1152 = vcmp.le.f32.partialorder %v1151, 0.7853982
        %vm1153 = vcmp.lt.s32.totalorder %v311, 0
        %v1154 = vand.u32 %v311, 2139095040
        %v1155 = vshrl.u32 %v1154, 23
        %v1156 = vsub.s32 %v1155, 127
        %v1157 = vand.u32 2147483647, %v311
        %v1158 = vand.u32 %v1157, 8388607
        %v1159 = vor.u32 %v1158, 8388608
        %v1160 = vsub.s32 0, %v1159
        %v1161 = vadd.s32 %v1156, 1
        %vm1162 = vcmp.gt.s32.totalorder %v1161, 0
        %v1163 = vsel %vm1162, %v1161, 0
        %v1164 = vshrl.u32 %v1163, 5
        %v1165 = vand.u32 %v1163, 31
        %v1166 = vsub.s32 32, %v1165
        %v1167 = vshrl.u32 683565275, %v1166
        %v1168 = vshll.u32 683565275, %v1165
        %v1169 = vshrl.u32 2475754826, %v1166
        %v1170 = vor.u32 %v1168, %v1169
        %v1171 = vshll.u32 2475754826, %v1165
        %v1172 = vshrl.u32 2131351028, %v1166
        %v1173 = vor.u32 %v1171, %v1172
        %v1174 = vshll.u32 2131351028, %v1165
        %v1175 = vshrl.u32 2102212464, %v1166
        %v1176 = vor.u32 %v1174, %v1175
        %v1177 = vshll.u32 2102212464, %v1165
        %v1178 = vshrl.u32 920167782, %v1166
        %v1179 = vor.u32 %v1177, %v1178
        %v1180 = vshll.u32 920167782, %v1165
        %v1181 = vshrl.u32 1326507024, %v1166
        %v1182 = vor.u32 %v1180, %v1181
        %vm1183 = vcmp.lt.s32.totalorder %v1164, 1
        %vm1184 = vcmp.lt.s32.totalorder %v1164, 2
        %vm1185 = vcmp.lt.s32.totalorder %v1164, 3
        %vm1186 = vcmp.lt.s32.totalorder %v1164, 4
        %v1187 = vsel %vm1183, %v1167, %v1170
        %v1188 = vsel %vm1186, %v1176, 2102212464
        %v1189 = vsel %vm1185, %v1173, %v1188
        %v1190 = vsel %vm1184, %v1187, %v1189
        %v1191 = vsel %vm1183, %v1170, %v1173
        %v1192 = vsel %vm1186, %v1179, 920167782
        %v1193 = vsel %vm1185, %v1176, %v1192
        %v1194 = vsel %vm1184, %v1191, %v1193
        %v1195 = vsel %vm1183, %v1173, %v1176
        %v1196 = vsel %vm1186, %v1182, 1326507024
        %v1197 = vsel %vm1185, %v1179, %v1196
        %v1198 = vsel %vm1184, %v1195, %v1197
        %v1199 = vshll.u32 %v1159, 8
        %v1200 = vmul.u32.u64.compose %v1199, %v1198
        %v1201 = vextract.low.u32 %v1200
        %v1202 = vextract.high.u32 %v1200
        %v1203 = vmul.u32.u64.compose %v1199, %v1194
        %v1204 = vextract.low.u32 %v1203
        %v1205 = vextract.high.u32 %v1203
        %v1206 = vmul.u32 %v1199, %v1190
        %v1207 = vadd.s32 %v1202, %v1204
        %vm1208 = vc.u32 %v1202, %v1204
        %v1209 = vadd.s32 %v1205, 1
        %v1210 = vsel %vm1208, %v1209, %v1205
        %v1211 = vadd.s32 %v1206, %v1210
        %v1212 = vadd.s32 %v1211, 536870912
        %v1213 = vshrl.u32 %v1212, 30
        %v1214 = vshll.u32 %v1213, 30
        %v1215 = vsub.s32 %v1211, %v1214
        %vm1216 = vcmp.lt.s32.totalorder %v1215, 0
        %v1217 = vsub.s32 0, %v1215
        %v1218 = vsel %vm1216, %v1217, %v1215
        %v1219 = vclz %v1218
        %v1220 = vsub.s32 %v1219, 2
        %vm1221 = vcmp.gt.s32.totalorder 0, %v1220
        %v1222 = vsel %vm1221, 0, %v1220
        %v1223 = vsub.s32 32, %v1222
        %v1224 = vshll.u32 %v1215, %v1222
        %v1225 = vshrl.u32 %v1207, %v1223
        %v1226 = vor.u32 %v1224, %v1225
        %v1227 = vsub.s32 4294967266, %v1222
        %v1228 = vadd.s32 %v1227, 127
        %v1229 = vshll.u32 %v1228, 23
        %v1230 = vor.u32 4788187, %v1229
        %v1231 = vand.u32 2147483647, %v1230
        %v1233 = vcvt.s32.f32 %v1226
        %v1234 = vmul.f32 %v1233, %v1231
        %v1235 = vxor.u32 %v1234, 2147483648
        %v1236 = vsel %vm1153, %v1235, %v1234
        %v1237 = vsub.s32 4, %v1213
        %v1238 = vsel %vm1153, %v1237, %v1213
        %v1239 = vsel %vm1152, %v311, %v1236
        %v1240 = vsel %vm1152, 0, %v1238
        %v1241 = vcosq.f32.pop %v1239
        %v1242 = vsinq.f32.pop %v1239
        %vm1243 = vweird.f32 %v311
        %v1244 = vadd.s32 %v1240, 3
        %v1245 = vand.u32 %v1244, 3
        %vm1246 = vcmp.lt.s32.totalorder %v1245, 2
        %vm1247 = vcmp.eq.s32.totalorder %v1245, 0
        %v1248 = vxor.u32 %v1242, 2147483648
        %v1249 = vsel %vm1247, %v1241, %v1248
        %vm1250 = vcmp.eq.s32.totalorder %v1245, 2
        %v1251 = vxor.u32 %v1241, 2147483648
        %v1252 = vsel %vm1250, %v1251, %v1242
        %v1253 = vsel %vm1246, %v1249, %v1252
        %v1254 = vsel %vm1243, nan, %v1253
        %v1255 = vand.u32 2147483647, %v312
        %vm1256 = vcmp.le.f32.partialorder %v1255, 0.7853982
        %vm1257 = vcmp.lt.s32.totalorder %v312, 0
        %v1258 = vand.u32 %v312, 2139095040
        %v1259 = vshrl.u32 %v1258, 23
        %v1260 = vsub.s32 %v1259, 127
        %v1261 = vand.u32 2147483647, %v312
        %v1262 = vand.u32 %v1261, 8388607
        %v1263 = vor.u32 %v1262, 8388608
        %v1264 = vsub.s32 0, %v1263
        %v1265 = vadd.s32 %v1260, 1
        %vm1266 = vcmp.gt.s32.totalorder %v1265, 0
        %v1267 = vsel %vm1266, %v1265, 0
        %v1268 = vshrl.u32 %v1267, 5
        %v1269 = vand.u32 %v1267, 31
        %v1270 = vsub.s32 32, %v1269
        %v1271 = vshrl.u32 683565275, %v1270
        %v1272 = vshll.u32 683565275, %v1269
        %v1273 = vshrl.u32 2475754826, %v1270
        %v1274 = vor.u32 %v1272, %v1273
        %v1275 = vshll.u32 2475754826, %v1269
        %v1276 = vshrl.u32 2131351028, %v1270
        %v1277 = vor.u32 %v1275, %v1276
        %v1278 = vshll.u32 2131351028, %v1269
        %v1279 = vshrl.u32 2102212464, %v1270
        %v1280 = vor.u32 %v1278, %v1279
        %v1281 = vshll.u32 2102212464, %v1269
        %v1282 = vshrl.u32 920167782, %v1270
        %v1283 = vor.u32 %v1281, %v1282
        %v1284 = vshll.u32 920167782, %v1269
        %v1285 = vshrl.u32 1326507024, %v1270
        %v1286 = vor.u32 %v1284, %v1285
        %vm1287 = vcmp.lt.s32.totalorder %v1268, 1
        %vm1288 = vcmp.lt.s32.totalorder %v1268, 2
        %vm1289 = vcmp.lt.s32.totalorder %v1268, 3
        %vm1290 = vcmp.lt.s32.totalorder %v1268, 4
        %v1291 = vsel %vm1287, %v1271, %v1274
        %v1292 = vsel %vm1290, %v1280, 2102212464
        %v1293 = vsel %vm1289, %v1277, %v1292
        %v1294 = vsel %vm1288, %v1291, %v1293
        %v1295 = vsel %vm1287, %v1274, %v1277
        %v1296 = vsel %vm1290, %v1283, 920167782
        %v1297 = vsel %vm1289, %v1280, %v1296
        %v1298 = vsel %vm1288, %v1295, %v1297
        %v1299 = vsel %vm1287, %v1277, %v1280
        %v1300 = vsel %vm1290, %v1286, 1326507024
        %v1301 = vsel %vm1289, %v1283, %v1300
        %v1302 = vsel %vm1288, %v1299, %v1301
        %v1303 = vshll.u32 %v1263, 8
        %v1304 = vmul.u32.u64.compose %v1303, %v1302
        %v1305 = vextract.low.u32 %v1304
        %v1306 = vextract.high.u32 %v1304
        %v1307 = vmul.u32.u64.compose %v1303, %v1298
        %v1308 = vextract.low.u32 %v1307
        %v1309 = vextract.high.u32 %v1307
        %v1310 = vmul.u32 %v1303, %v1294
        %v1311 = vadd.s32 %v1306, %v1308
        %vm1312 = vc.u32 %v1306, %v1308
        %v1313 = vadd.s32 %v1309, 1
        %v1314 = vsel %vm1312, %v1313, %v1309
        %v1315 = vadd.s32 %v1310, %v1314
        %v1316 = vadd.s32 %v1315, 536870912
        %v1317 = vshrl.u32 %v1316, 30
        %v1318 = vshll.u32 %v1317, 30
        %v1319 = vsub.s32 %v1315, %v1318
        %vm1320 = vcmp.lt.s32.totalorder %v1319, 0
        %v1321 = vsub.s32 0, %v1319
        %v1322 = vsel %vm1320, %v1321, %v1319
        %v1323 = vclz %v1322
        %v1324 = vsub.s32 %v1323, 2
        %vm1325 = vcmp.gt.s32.totalorder 0, %v1324
        %v1326 = vsel %vm1325, 0, %v1324
        %v1327 = vsub.s32 32, %v1326
        %v1328 = vshll.u32 %v1319, %v1326
        %v1329 = vshrl.u32 %v1311, %v1327
        %v1330 = vor.u32 %v1328, %v1329
        %v1331 = vsub.s32 4294967266, %v1326
        %v1332 = vadd.s32 %v1331, 127
        %v1333 = vshll.u32 %v1332, 23
        %v1334 = vor.u32 4788187, %v1333
        %v1335 = vand.u32 2147483647, %v1334
        %v1337 = vcvt.s32.f32 %v1330
        %v1338 = vmul.f32 %v1337, %v1335
        %v1339 = vxor.u32 %v1338, 2147483648
        %v1340 = vsel %vm1257, %v1339, %v1338
        %v1341 = vsub.s32 4, %v1317
        %v1342 = vsel %vm1257, %v1341, %v1317
        %v1343 = vsel %vm1256, %v312, %v1340
        %v1344 = vsel %vm1256, 0, %v1342
        %v1345 = vcosq.f32.pop %v1343
        %v1346 = vsinq.f32.pop %v1343
        %vm1347 = vweird.f32 %v312
        %v1348 = vadd.s32 %v1344, 3
        %v1349 = vand.u32 %v1348, 3
        %vm1350 = vcmp.lt.s32.totalorder %v1349, 2
        %vm1351 = vcmp.eq.s32.totalorder %v1349, 0
        %v1352 = vxor.u32 %v1346, 2147483648
        %v1353 = vsel %vm1351, %v1345, %v1352
        %vm1354 = vcmp.eq.s32.totalorder %v1349, 2
        %v1355 = vxor.u32 %v1345, 2147483648
        %v1356 = vsel %vm1354, %v1355, %v1346
        %v1357 = vsel %vm1350, %v1353, %v1356
        %v1358 = vsel %vm1347, nan, %v1357
        %v1359 = vand.u32 2147483647, %v313
        %vm1360 = vcmp.le.f32.partialorder %v1359, 0.7853982
        %vm1361 = vcmp.lt.s32.totalorder %v313, 0
        %v1362 = vand.u32 %v313, 2139095040
        %v1363 = vshrl.u32 %v1362, 23
        %v1364 = vsub.s32 %v1363, 127
        %v1365 = vand.u32 2147483647, %v313
        %v1366 = vand.u32 %v1365, 8388607
        %v1367 = vor.u32 %v1366, 8388608
        %v1368 = vsub.s32 0, %v1367
        %v1369 = vadd.s32 %v1364, 1
        %vm1370 = vcmp.gt.s32.totalorder %v1369, 0
        %v1371 = vsel %vm1370, %v1369, 0
        %v1372 = vshrl.u32 %v1371, 5
        %v1373 = vand.u32 %v1371, 31
        %v1374 = vsub.s32 32, %v1373
        %v1375 = vshrl.u32 683565275, %v1374
        %v1376 = vshll.u32 683565275, %v1373
        %v1377 = vshrl.u32 2475754826, %v1374
        %v1378 = vor.u32 %v1376, %v1377
        %v1379 = vshll.u32 2475754826, %v1373
        %v1380 = vshrl.u32 2131351028, %v1374
        %v1381 = vor.u32 %v1379, %v1380
        %v1382 = vshll.u32 2131351028, %v1373
        %v1383 = vshrl.u32 2102212464, %v1374
        %v1384 = vor.u32 %v1382, %v1383
        %v1385 = vshll.u32 2102212464, %v1373
        %v1386 = vshrl.u32 920167782, %v1374
        %v1387 = vor.u32 %v1385, %v1386
        %v1388 = vshll.u32 920167782, %v1373
        %v1389 = vshrl.u32 1326507024, %v1374
        %v1390 = vor.u32 %v1388, %v1389
        %vm1391 = vcmp.lt.s32.totalorder %v1372, 1
        %vm1392 = vcmp.lt.s32.totalorder %v1372, 2
        %vm1393 = vcmp.lt.s32.totalorder %v1372, 3
        %vm1394 = vcmp.lt.s32.totalorder %v1372, 4
        %v1395 = vsel %vm1391, %v1375, %v1378
        %v1396 = vsel %vm1394, %v1384, 2102212464
        %v1397 = vsel %vm1393, %v1381, %v1396
        %v1398 = vsel %vm1392, %v1395, %v1397
        %v1399 = vsel %vm1391, %v1378, %v1381
        %v1400 = vsel %vm1394, %v1387, 920167782
        %v1401 = vsel %vm1393, %v1384, %v1400
        %v1402 = vsel %vm1392, %v1399, %v1401
        %v1403 = vsel %vm1391, %v1381, %v1384
        %v1404 = vsel %vm1394, %v1390, 1326507024
        %v1405 = vsel %vm1393, %v1387, %v1404
        %v1406 = vsel %vm1392, %v1403, %v1405
        %v1407 = vshll.u32 %v1367, 8
        %v1408 = vmul.u32.u64.compose %v1407, %v1406
        %v1409 = vextract.low.u32 %v1408
        %v1410 = vextract.high.u32 %v1408
        %v1411 = vmul.u32.u64.compose %v1407, %v1402
        %v1412 = vextract.low.u32 %v1411
        %v1413 = vextract.high.u32 %v1411
        %v1414 = vmul.u32 %v1407, %v1398
        %v1415 = vadd.s32 %v1410, %v1412
        %vm1416 = vc.u32 %v1410, %v1412
        %v1417 = vadd.s32 %v1413, 1
        %v1418 = vsel %vm1416, %v1417, %v1413
        %v1419 = vadd.s32 %v1414, %v1418
        %v1420 = vadd.s32 %v1419, 536870912
        %v1421 = vshrl.u32 %v1420, 30
        %v1422 = vshll.u32 %v1421, 30
        %v1423 = vsub.s32 %v1419, %v1422
        %vm1424 = vcmp.lt.s32.totalorder %v1423, 0
        %v1425 = vsub.s32 0, %v1423
        %v1426 = vsel %vm1424, %v1425, %v1423
        %v1427 = vclz %v1426
        %v1428 = vsub.s32 %v1427, 2
        %vm1429 = vcmp.gt.s32.totalorder 0, %v1428
        %v1430 = vsel %vm1429, 0, %v1428
        %v1431 = vsub.s32 32, %v1430
        %v1432 = vshll.u32 %v1423, %v1430
        %v1433 = vshrl.u32 %v1415, %v1431
        %v1434 = vor.u32 %v1432, %v1433
        %v1435 = vsub.s32 4294967266, %v1430
        %v1436 = vadd.s32 %v1435, 127
        %v1437 = vshll.u32 %v1436, 23
        %v1438 = vor.u32 4788187, %v1437
        %v1439 = vand.u32 2147483647, %v1438
        %v1441 = vcvt.s32.f32 %v1434
        %v1442 = vmul.f32 %v1441, %v1439
        %v1443 = vxor.u32 %v1442, 2147483648
        %v1444 = vsel %vm1361, %v1443, %v1442
        %v1445 = vsub.s32 4, %v1421
        %v1446 = vsel %vm1361, %v1445, %v1421
        %v1447 = vsel %vm1360, %v313, %v1444
        %v1448 = vsel %vm1360, 0, %v1446
        %v1449 = vcosq.f32.pop %v1447
        %v1450 = vsinq.f32.pop %v1447
        %vm1451 = vweird.f32 %v313
        %v1452 = vadd.s32 %v1448, 3
        %v1453 = vand.u32 %v1452, 3
        %vm1454 = vcmp.lt.s32.totalorder %v1453, 2
        %vm1455 = vcmp.eq.s32.totalorder %v1453, 0
        %v1456 = vxor.u32 %v1450, 2147483648
        %v1457 = vsel %vm1455, %v1449, %v1456
        %vm1458 = vcmp.eq.s32.totalorder %v1453, 2
        %v1459 = vxor.u32 %v1449, 2147483648
        %v1460 = vsel %vm1458, %v1459, %v1450
        %v1461 = vsel %vm1454, %v1457, %v1460
        %v1462 = vsel %vm1451, nan, %v1461
        %v1463 = vand.u32 2147483647, %v314
        %vm1464 = vcmp.le.f32.partialorder %v1463, 0.7853982
        %vm1465 = vcmp.lt.s32.totalorder %v314, 0
        %v1466 = vand.u32 %v314, 2139095040
        %v1467 = vshrl.u32 %v1466, 23
        %v1468 = vsub.s32 %v1467, 127
        %v1469 = vand.u32 2147483647, %v314
        %v1470 = vand.u32 %v1469, 8388607
        %v1471 = vor.u32 %v1470, 8388608
        %v1472 = vsub.s32 0, %v1471
        %v1473 = vadd.s32 %v1468, 1
        %vm1474 = vcmp.gt.s32.totalorder %v1473, 0
        %v1475 = vsel %vm1474, %v1473, 0
        %v1476 = vshrl.u32 %v1475, 5
        %v1477 = vand.u32 %v1475, 31
        %v1478 = vsub.s32 32, %v1477
        %v1479 = vshrl.u32 683565275, %v1478
        %v1480 = vshll.u32 683565275, %v1477
        %v1481 = vshrl.u32 2475754826, %v1478
        %v1482 = vor.u32 %v1480, %v1481
        %v1483 = vshll.u32 2475754826, %v1477
        %v1484 = vshrl.u32 2131351028, %v1478
        %v1485 = vor.u32 %v1483, %v1484
        %v1486 = vshll.u32 2131351028, %v1477
        %v1487 = vshrl.u32 2102212464, %v1478
        %v1488 = vor.u32 %v1486, %v1487
        %v1489 = vshll.u32 2102212464, %v1477
        %v1490 = vshrl.u32 920167782, %v1478
        %v1491 = vor.u32 %v1489, %v1490
        %v1492 = vshll.u32 920167782, %v1477
        %v1493 = vshrl.u32 1326507024, %v1478
        %v1494 = vor.u32 %v1492, %v1493
        %vm1495 = vcmp.lt.s32.totalorder %v1476, 1
        %vm1496 = vcmp.lt.s32.totalorder %v1476, 2
        %vm1497 = vcmp.lt.s32.totalorder %v1476, 3
        %vm1498 = vcmp.lt.s32.totalorder %v1476, 4
        %v1499 = vsel %vm1495, %v1479, %v1482
        %v1500 = vsel %vm1498, %v1488, 2102212464
        %v1501 = vsel %vm1497, %v1485, %v1500
        %v1502 = vsel %vm1496, %v1499, %v1501
        %v1503 = vsel %vm1495, %v1482, %v1485
        %v1504 = vsel %vm1498, %v1491, 920167782
        %v1505 = vsel %vm1497, %v1488, %v1504
        %v1506 = vsel %vm1496, %v1503, %v1505
        %v1507 = vsel %vm1495, %v1485, %v1488
        %v1508 = vsel %vm1498, %v1494, 1326507024
        %v1509 = vsel %vm1497, %v1491, %v1508
        %v1510 = vsel %vm1496, %v1507, %v1509
        %v1511 = vshll.u32 %v1471, 8
        %v1512 = vmul.u32.u64.compose %v1511, %v1510
        %v1513 = vextract.low.u32 %v1512
        %v1514 = vextract.high.u32 %v1512
        %v1515 = vmul.u32.u64.compose %v1511, %v1506
        %v1516 = vextract.low.u32 %v1515
        %v1517 = vextract.high.u32 %v1515
        %v1518 = vmul.u32 %v1511, %v1502
        %v1519 = vadd.s32 %v1514, %v1516
        %vm1520 = vc.u32 %v1514, %v1516
        %v1521 = vadd.s32 %v1517, 1
        %v1522 = vsel %vm1520, %v1521, %v1517
        %v1523 = vadd.s32 %v1518, %v1522
        %v1524 = vadd.s32 %v1523, 536870912
        %v1525 = vshrl.u32 %v1524, 30
        %v1526 = vshll.u32 %v1525, 30
        %v1527 = vsub.s32 %v1523, %v1526
        %vm1528 = vcmp.lt.s32.totalorder %v1527, 0
        %v1529 = vsub.s32 0, %v1527
        %v1530 = vsel %vm1528, %v1529, %v1527
        %v1531 = vclz %v1530
        %v1532 = vsub.s32 %v1531, 2
        %vm1533 = vcmp.gt.s32.totalorder 0, %v1532
        %v1534 = vsel %vm1533, 0, %v1532
        %v1535 = vsub.s32 32, %v1534
        %v1536 = vshll.u32 %v1527, %v1534
        %v1537 = vshrl.u32 %v1519, %v1535
        %v1538 = vor.u32 %v1536, %v1537
        %v1539 = vsub.s32 4294967266, %v1534
        %v1540 = vadd.s32 %v1539, 127
        %v1541 = vshll.u32 %v1540, 23
        %v1542 = vor.u32 4788187, %v1541
        %v1543 = vand.u32 2147483647, %v1542
        %v1545 = vcvt.s32.f32 %v1538
        %v1546 = vmul.f32 %v1545, %v1543
        %v1547 = vxor.u32 %v1546, 2147483648
        %v1548 = vsel %vm1465, %v1547, %v1546
        %v1549 = vsub.s32 4, %v1525
        %v1550 = vsel %vm1465, %v1549, %v1525
        %v1551 = vsel %vm1464, %v314, %v1548
        %v1552 = vsel %vm1464, 0, %v1550
        %v1553 = vcosq.f32.pop %v1551
        %v1554 = vsinq.f32.pop %v1551
        %vm1555 = vweird.f32 %v314
        %v1556 = vadd.s32 %v1552, 3
        %v1557 = vand.u32 %v1556, 3
        %vm1558 = vcmp.lt.s32.totalorder %v1557, 2
        %vm1559 = vcmp.eq.s32.totalorder %v1557, 0
        %v1560 = vxor.u32 %v1554, 2147483648
        %v1561 = vsel %vm1559, %v1553, %v1560
        %vm1562 = vcmp.eq.s32.totalorder %v1557, 2
        %v1563 = vxor.u32 %v1553, 2147483648
        %v1564 = vsel %vm1562, %v1563, %v1554
        %v1565 = vsel %vm1558, %v1561, %v1564
        %v1566 = vsel %vm1555, nan, %v1565
        %v1567 = vand.u32 2147483647, %v315
        %vm1568 = vcmp.le.f32.partialorder %v1567, 0.7853982
        %vm1569 = vcmp.lt.s32.totalorder %v315, 0
        %v1570 = vand.u32 %v315, 2139095040
        %v1571 = vshrl.u32 %v1570, 23
        %v1572 = vsub.s32 %v1571, 127
        %v1573 = vand.u32 2147483647, %v315
        %v1574 = vand.u32 %v1573, 8388607
        %v1575 = vor.u32 %v1574, 8388608
        %v1576 = vsub.s32 0, %v1575
        %v1577 = vadd.s32 %v1572, 1
        %vm1578 = vcmp.gt.s32.totalorder %v1577, 0
        %v1579 = vsel %vm1578, %v1577, 0
        %v1580 = vshrl.u32 %v1579, 5
        %v1581 = vand.u32 %v1579, 31
        %v1582 = vsub.s32 32, %v1581
        %v1583 = vshrl.u32 683565275, %v1582
        %v1584 = vshll.u32 683565275, %v1581
        %v1585 = vshrl.u32 2475754826, %v1582
        %v1586 = vor.u32 %v1584, %v1585
        %v1587 = vshll.u32 2475754826, %v1581
        %v1588 = vshrl.u32 2131351028, %v1582
        %v1589 = vor.u32 %v1587, %v1588
        %v1590 = vshll.u32 2131351028, %v1581
        %v1591 = vshrl.u32 2102212464, %v1582
        %v1592 = vor.u32 %v1590, %v1591
        %v1593 = vshll.u32 2102212464, %v1581
        %v1594 = vshrl.u32 920167782, %v1582
        %v1595 = vor.u32 %v1593, %v1594
        %v1596 = vshll.u32 920167782, %v1581
        %v1597 = vshrl.u32 1326507024, %v1582
        %v1598 = vor.u32 %v1596, %v1597
        %vm1599 = vcmp.lt.s32.totalorder %v1580, 1
        %vm1600 = vcmp.lt.s32.totalorder %v1580, 2
        %vm1601 = vcmp.lt.s32.totalorder %v1580, 3
        %vm1602 = vcmp.lt.s32.totalorder %v1580, 4
        %v1603 = vsel %vm1599, %v1583, %v1586
        %v1604 = vsel %vm1602, %v1592, 2102212464
        %v1605 = vsel %vm1601, %v1589, %v1604
        %v1606 = vsel %vm1600, %v1603, %v1605
        %v1607 = vsel %vm1599, %v1586, %v1589
        %v1608 = vsel %vm1602, %v1595, 920167782
        %v1609 = vsel %vm1601, %v1592, %v1608
        %v1610 = vsel %vm1600, %v1607, %v1609
        %v1611 = vsel %vm1599, %v1589, %v1592
        %v1612 = vsel %vm1602, %v1598, 1326507024
        %v1613 = vsel %vm1601, %v1595, %v1612
        %v1614 = vsel %vm1600, %v1611, %v1613
        %v1615 = vshll.u32 %v1575, 8
        %v1616 = vmul.u32.u64.compose %v1615, %v1614
        %v1617 = vextract.low.u32 %v1616
        %v1618 = vextract.high.u32 %v1616
        %v1619 = vmul.u32.u64.compose %v1615, %v1610
        %v1620 = vextract.low.u32 %v1619
        %v1621 = vextract.high.u32 %v1619
        %v1622 = vmul.u32 %v1615, %v1606
        %v1623 = vadd.s32 %v1618, %v1620
        %vm1624 = vc.u32 %v1618, %v1620
        %v1625 = vadd.s32 %v1621, 1
        %v1626 = vsel %vm1624, %v1625, %v1621
        %v1627 = vadd.s32 %v1622, %v1626
        %v1628 = vadd.s32 %v1627, 536870912
        %v1629 = vshrl.u32 %v1628, 30
        %v1630 = vshll.u32 %v1629, 30
        %v1631 = vsub.s32 %v1627, %v1630
        %vm1632 = vcmp.lt.s32.totalorder %v1631, 0
        %v1633 = vsub.s32 0, %v1631
        %v1634 = vsel %vm1632, %v1633, %v1631
        %v1635 = vclz %v1634
        %v1636 = vsub.s32 %v1635, 2
        %vm1637 = vcmp.gt.s32.totalorder 0, %v1636
        %v1638 = vsel %vm1637, 0, %v1636
        %v1639 = vsub.s32 32, %v1638
        %v1640 = vshll.u32 %v1631, %v1638
        %v1641 = vshrl.u32 %v1623, %v1639
        %v1642 = vor.u32 %v1640, %v1641
        %v1643 = vsub.s32 4294967266, %v1638
        %v1644 = vadd.s32 %v1643, 127
        %v1645 = vshll.u32 %v1644, 23
        %v1646 = vor.u32 4788187, %v1645
        %v1647 = vand.u32 2147483647, %v1646
        %v1649 = vcvt.s32.f32 %v1642
        %v1650 = vmul.f32 %v1649, %v1647
        %v1651 = vxor.u32 %v1650, 2147483648
        %v1652 = vsel %vm1569, %v1651, %v1650
        %v1653 = vsub.s32 4, %v1629
        %v1654 = vsel %vm1569, %v1653, %v1629
        %v1655 = vsel %vm1568, %v315, %v1652
        %v1656 = vsel %vm1568, 0, %v1654
        %v1657 = vcosq.f32.pop %v1655
        %v1658 = vsinq.f32.pop %v1655
        %vm1659 = vweird.f32 %v315
        %v1660 = vadd.s32 %v1656, 3
        %v1661 = vand.u32 %v1660, 3
        %vm1662 = vcmp.lt.s32.totalorder %v1661, 2
        %vm1663 = vcmp.eq.s32.totalorder %v1661, 0
        %v1664 = vxor.u32 %v1658, 2147483648
        %v1665 = vsel %vm1663, %v1657, %v1664
        %vm1666 = vcmp.eq.s32.totalorder %v1661, 2
        %v1667 = vxor.u32 %v1657, 2147483648
        %v1668 = vsel %vm1666, %v1667, %v1658
        %v1669 = vsel %vm1662, %v1665, %v1668
        %v1670 = vsel %vm1659, nan, %v1669
        %v1671 = vand.u32 2147483647, %v316
        %vm1672 = vcmp.le.f32.partialorder %v1671, 0.7853982
        %vm1673 = vcmp.lt.s32.totalorder %v316, 0
        %v1674 = vand.u32 %v316, 2139095040
        %v1675 = vshrl.u32 %v1674, 23
        %v1676 = vsub.s32 %v1675, 127
        %v1677 = vand.u32 2147483647, %v316
        %v1678 = vand.u32 %v1677, 8388607
        %v1679 = vor.u32 %v1678, 8388608
        %v1680 = vsub.s32 0, %v1679
        %v1681 = vadd.s32 %v1676, 1
        %vm1682 = vcmp.gt.s32.totalorder %v1681, 0
        %v1683 = vsel %vm1682, %v1681, 0
        %v1684 = vshrl.u32 %v1683, 5
        %v1685 = vand.u32 %v1683, 31
        %v1686 = vsub.s32 32, %v1685
        %v1687 = vshrl.u32 683565275, %v1686
        %v1688 = vshll.u32 683565275, %v1685
        %v1689 = vshrl.u32 2475754826, %v1686
        %v1690 = vor.u32 %v1688, %v1689
        %v1691 = vshll.u32 2475754826, %v1685
        %v1692 = vshrl.u32 2131351028, %v1686
        %v1693 = vor.u32 %v1691, %v1692
        %v1694 = vshll.u32 2131351028, %v1685
        %v1695 = vshrl.u32 2102212464, %v1686
        %v1696 = vor.u32 %v1694, %v1695
        %v1697 = vshll.u32 2102212464, %v1685
        %v1698 = vshrl.u32 920167782, %v1686
        %v1699 = vor.u32 %v1697, %v1698
        %v1700 = vshll.u32 920167782, %v1685
        %v1701 = vshrl.u32 1326507024, %v1686
        %v1702 = vor.u32 %v1700, %v1701
        %vm1703 = vcmp.lt.s32.totalorder %v1684, 1
        %vm1704 = vcmp.lt.s32.totalorder %v1684, 2
        %vm1705 = vcmp.lt.s32.totalorder %v1684, 3
        %vm1706 = vcmp.lt.s32.totalorder %v1684, 4
        %v1707 = vsel %vm1703, %v1687, %v1690
        %v1708 = vsel %vm1706, %v1696, 2102212464
        %v1709 = vsel %vm1705, %v1693, %v1708
        %v1710 = vsel %vm1704, %v1707, %v1709
        %v1711 = vsel %vm1703, %v1690, %v1693
        %v1712 = vsel %vm1706, %v1699, 920167782
        %v1713 = vsel %vm1705, %v1696, %v1712
        %v1714 = vsel %vm1704, %v1711, %v1713
        %v1715 = vsel %vm1703, %v1693, %v1696
        %v1716 = vsel %vm1706, %v1702, 1326507024
        %v1717 = vsel %vm1705, %v1699, %v1716
        %v1718 = vsel %vm1704, %v1715, %v1717
        %v1719 = vshll.u32 %v1679, 8
        %v1720 = vmul.u32.u64.compose %v1719, %v1718
        %v1721 = vextract.low.u32 %v1720
        %v1722 = vextract.high.u32 %v1720
        %v1723 = vmul.u32.u64.compose %v1719, %v1714
        %v1724 = vextract.low.u32 %v1723
        %v1725 = vextract.high.u32 %v1723
        %v1726 = vmul.u32 %v1719, %v1710
        %v1727 = vadd.s32 %v1722, %v1724
        %vm1728 = vc.u32 %v1722, %v1724
        %v1729 = vadd.s32 %v1725, 1
        %v1730 = vsel %vm1728, %v1729, %v1725
        %v1731 = vadd.s32 %v1726, %v1730
        %v1732 = vadd.s32 %v1731, 536870912
        %v1733 = vshrl.u32 %v1732, 30
        %v1734 = vshll.u32 %v1733, 30
        %v1735 = vsub.s32 %v1731, %v1734
        %vm1736 = vcmp.lt.s32.totalorder %v1735, 0
        %v1737 = vsub.s32 0, %v1735
        %v1738 = vsel %vm1736, %v1737, %v1735
        %v1739 = vclz %v1738
        %v1740 = vsub.s32 %v1739, 2
        %vm1741 = vcmp.gt.s32.totalorder 0, %v1740
        %v1742 = vsel %vm1741, 0, %v1740
        %v1743 = vsub.s32 32, %v1742
        %v1744 = vshll.u32 %v1735, %v1742
        %v1745 = vshrl.u32 %v1727, %v1743
        %v1746 = vor.u32 %v1744, %v1745
        %v1747 = vsub.s32 4294967266, %v1742
        %v1748 = vadd.s32 %v1747, 127
        %v1749 = vshll.u32 %v1748, 23
        %v1750 = vor.u32 4788187, %v1749
        %v1751 = vand.u32 2147483647, %v1750
        %v1753 = vcvt.s32.f32 %v1746
        %v1754 = vmul.f32 %v1753, %v1751
        %v1755 = vxor.u32 %v1754, 2147483648
        %v1756 = vsel %vm1673, %v1755, %v1754
        %v1757 = vsub.s32 4, %v1733
        %v1758 = vsel %vm1673, %v1757, %v1733
        %v1759 = vsel %vm1672, %v316, %v1756
        %v1760 = vsel %vm1672, 0, %v1758
        %v1761 = vcosq.f32.pop %v1759
        %v1762 = vsinq.f32.pop %v1759
        %vm1763 = vweird.f32 %v316
        %v1764 = vadd.s32 %v1760, 3
        %v1765 = vand.u32 %v1764, 3
        %vm1766 = vcmp.lt.s32.totalorder %v1765, 2
        %vm1767 = vcmp.eq.s32.totalorder %v1765, 0
        %v1768 = vxor.u32 %v1762, 2147483648
        %v1769 = vsel %vm1767, %v1761, %v1768
        %vm1770 = vcmp.eq.s32.totalorder %v1765, 2
        %v1771 = vxor.u32 %v1761, 2147483648
        %v1772 = vsel %vm1770, %v1771, %v1762
        %v1773 = vsel %vm1766, %v1769, %v1772
        %v1774 = vsel %vm1763, nan, %v1773
        %v1775 = vand.u32 2147483647, %v317
        %vm1776 = vcmp.le.f32.partialorder %v1775, 0.7853982
        %vm1777 = vcmp.lt.s32.totalorder %v317, 0
        %v1778 = vand.u32 %v317, 2139095040
        %v1779 = vshrl.u32 %v1778, 23
        %v1780 = vsub.s32 %v1779, 127
        %v1781 = vand.u32 2147483647, %v317
        %v1782 = vand.u32 %v1781, 8388607
        %v1783 = vor.u32 %v1782, 8388608
        %v1784 = vsub.s32 0, %v1783
        %v1785 = vadd.s32 %v1780, 1
        %vm1786 = vcmp.gt.s32.totalorder %v1785, 0
        %v1787 = vsel %vm1786, %v1785, 0
        %v1788 = vshrl.u32 %v1787, 5
        %v1789 = vand.u32 %v1787, 31
        %v1790 = vsub.s32 32, %v1789
        %v1791 = vshrl.u32 683565275, %v1790
        %v1792 = vshll.u32 683565275, %v1789
        %v1793 = vshrl.u32 2475754826, %v1790
        %v1794 = vor.u32 %v1792, %v1793
        %v1795 = vshll.u32 2475754826, %v1789
        %v1796 = vshrl.u32 2131351028, %v1790
        %v1797 = vor.u32 %v1795, %v1796
        %v1798 = vshll.u32 2131351028, %v1789
        %v1799 = vshrl.u32 2102212464, %v1790
        %v1800 = vor.u32 %v1798, %v1799
        %v1801 = vshll.u32 2102212464, %v1789
        %v1802 = vshrl.u32 920167782, %v1790
        %v1803 = vor.u32 %v1801, %v1802
        %v1804 = vshll.u32 920167782, %v1789
        %v1805 = vshrl.u32 1326507024, %v1790
        %v1806 = vor.u32 %v1804, %v1805
        %vm1807 = vcmp.lt.s32.totalorder %v1788, 1
        %vm1808 = vcmp.lt.s32.totalorder %v1788, 2
        %vm1809 = vcmp.lt.s32.totalorder %v1788, 3
        %vm1810 = vcmp.lt.s32.totalorder %v1788, 4
        %v1811 = vsel %vm1807, %v1791, %v1794
        %v1812 = vsel %vm1810, %v1800, 2102212464
        %v1813 = vsel %vm1809, %v1797, %v1812
        %v1814 = vsel %vm1808, %v1811, %v1813
        %v1815 = vsel %vm1807, %v1794, %v1797
        %v1816 = vsel %vm1810, %v1803, 920167782
        %v1817 = vsel %vm1809, %v1800, %v1816
        %v1818 = vsel %vm1808, %v1815, %v1817
        %v1819 = vsel %vm1807, %v1797, %v1800
        %v1820 = vsel %vm1810, %v1806, 1326507024
        %v1821 = vsel %vm1809, %v1803, %v1820
        %v1822 = vsel %vm1808, %v1819, %v1821
        %v1823 = vshll.u32 %v1783, 8
        %v1824 = vmul.u32.u64.compose %v1823, %v1822
        %v1825 = vextract.low.u32 %v1824
        %v1826 = vextract.high.u32 %v1824
        %v1827 = vmul.u32.u64.compose %v1823, %v1818
        %v1828 = vextract.low.u32 %v1827
        %v1829 = vextract.high.u32 %v1827
        %v1830 = vmul.u32 %v1823, %v1814
        %v1831 = vadd.s32 %v1826, %v1828
        %vm1832 = vc.u32 %v1826, %v1828
        %v1833 = vadd.s32 %v1829, 1
        %v1834 = vsel %vm1832, %v1833, %v1829
        %v1835 = vadd.s32 %v1830, %v1834
        %v1836 = vadd.s32 %v1835, 536870912
        %v1837 = vshrl.u32 %v1836, 30
        %v1838 = vshll.u32 %v1837, 30
        %v1839 = vsub.s32 %v1835, %v1838
        %vm1840 = vcmp.lt.s32.totalorder %v1839, 0
        %v1841 = vsub.s32 0, %v1839
        %v1842 = vsel %vm1840, %v1841, %v1839
        %v1843 = vclz %v1842
        %v1844 = vsub.s32 %v1843, 2
        %vm1845 = vcmp.gt.s32.totalorder 0, %v1844
        %v1846 = vsel %vm1845, 0, %v1844
        %v1847 = vsub.s32 32, %v1846
        %v1848 = vshll.u32 %v1839, %v1846
        %v1849 = vshrl.u32 %v1831, %v1847
        %v1850 = vor.u32 %v1848, %v1849
        %v1851 = vsub.s32 4294967266, %v1846
        %v1852 = vadd.s32 %v1851, 127
        %v1853 = vshll.u32 %v1852, 23
        %v1854 = vor.u32 4788187, %v1853
        %v1855 = vand.u32 2147483647, %v1854
        %v1857 = vcvt.s32.f32 %v1850
        %v1858 = vmul.f32 %v1857, %v1855
        %v1859 = vxor.u32 %v1858, 2147483648
        %v1860 = vsel %vm1777, %v1859, %v1858
        %v1861 = vsub.s32 4, %v1837
        %v1862 = vsel %vm1777, %v1861, %v1837
        %v1863 = vsel %vm1776, %v317, %v1860
        %v1864 = vsel %vm1776, 0, %v1862
        %v1865 = vcosq.f32.pop %v1863
        %v1866 = vsinq.f32.pop %v1863
        %vm1867 = vweird.f32 %v317
        %v1868 = vadd.s32 %v1864, 3
        %v1869 = vand.u32 %v1868, 3
        %vm1870 = vcmp.lt.s32.totalorder %v1869, 2
        %vm1871 = vcmp.eq.s32.totalorder %v1869, 0
        %v1872 = vxor.u32 %v1866, 2147483648
        %v1873 = vsel %vm1871, %v1865, %v1872
        %vm1874 = vcmp.eq.s32.totalorder %v1869, 2
        %v1875 = vxor.u32 %v1865, 2147483648
        %v1876 = vsel %vm1874, %v1875, %v1866
        %v1877 = vsel %vm1870, %v1873, %v1876
        %v1878 = vsel %vm1867, nan, %v1877
        %v1879 = vand.u32 2147483647, %v318
        %vm1880 = vcmp.le.f32.partialorder %v1879, 0.7853982
        %vm1881 = vcmp.lt.s32.totalorder %v318, 0
        %v1882 = vand.u32 %v318, 2139095040
        %v1883 = vshrl.u32 %v1882, 23
        %v1884 = vsub.s32 %v1883, 127
        %v1885 = vand.u32 2147483647, %v318
        %v1886 = vand.u32 %v1885, 8388607
        %v1887 = vor.u32 %v1886, 8388608
        %v1888 = vsub.s32 0, %v1887
        %v1889 = vadd.s32 %v1884, 1
        %vm1890 = vcmp.gt.s32.totalorder %v1889, 0
        %v1891 = vsel %vm1890, %v1889, 0
        %v1892 = vshrl.u32 %v1891, 5
        %v1893 = vand.u32 %v1891, 31
        %v1894 = vsub.s32 32, %v1893
        %v1895 = vshrl.u32 683565275, %v1894
        %v1896 = vshll.u32 683565275, %v1893
        %v1897 = vshrl.u32 2475754826, %v1894
        %v1898 = vor.u32 %v1896, %v1897
        %v1899 = vshll.u32 2475754826, %v1893
        %v1900 = vshrl.u32 2131351028, %v1894
        %v1901 = vor.u32 %v1899, %v1900
        %v1902 = vshll.u32 2131351028, %v1893
        %v1903 = vshrl.u32 2102212464, %v1894
        %v1904 = vor.u32 %v1902, %v1903
        %v1905 = vshll.u32 2102212464, %v1893
        %v1906 = vshrl.u32 920167782, %v1894
        %v1907 = vor.u32 %v1905, %v1906
        %v1908 = vshll.u32 920167782, %v1893
        %v1909 = vshrl.u32 1326507024, %v1894
        %v1910 = vor.u32 %v1908, %v1909
        %vm1911 = vcmp.lt.s32.totalorder %v1892, 1
        %vm1912 = vcmp.lt.s32.totalorder %v1892, 2
        %vm1913 = vcmp.lt.s32.totalorder %v1892, 3
        %vm1914 = vcmp.lt.s32.totalorder %v1892, 4
        %v1915 = vsel %vm1911, %v1895, %v1898
        %v1916 = vsel %vm1914, %v1904, 2102212464
        %v1917 = vsel %vm1913, %v1901, %v1916
        %v1918 = vsel %vm1912, %v1915, %v1917
        %v1919 = vsel %vm1911, %v1898, %v1901
        %v1920 = vsel %vm1914, %v1907, 920167782
        %v1921 = vsel %vm1913, %v1904, %v1920
        %v1922 = vsel %vm1912, %v1919, %v1921
        %v1923 = vsel %vm1911, %v1901, %v1904
        %v1924 = vsel %vm1914, %v1910, 1326507024
        %v1925 = vsel %vm1913, %v1907, %v1924
        %v1926 = vsel %vm1912, %v1923, %v1925
        %v1927 = vshll.u32 %v1887, 8
        %v1928 = vmul.u32.u64.compose %v1927, %v1926
        %v1929 = vextract.low.u32 %v1928
        %v1930 = vextract.high.u32 %v1928
        %v1931 = vmul.u32.u64.compose %v1927, %v1922
        %v1932 = vextract.low.u32 %v1931
        %v1933 = vextract.high.u32 %v1931
        %v1934 = vmul.u32 %v1927, %v1918
        %v1935 = vadd.s32 %v1930, %v1932
        %vm1936 = vc.u32 %v1930, %v1932
        %v1937 = vadd.s32 %v1933, 1
        %v1938 = vsel %vm1936, %v1937, %v1933
        %v1939 = vadd.s32 %v1934, %v1938
        %v1940 = vadd.s32 %v1939, 536870912
        %v1941 = vshrl.u32 %v1940, 30
        %v1942 = vshll.u32 %v1941, 30
        %v1943 = vsub.s32 %v1939, %v1942
        %vm1944 = vcmp.lt.s32.totalorder %v1943, 0
        %v1945 = vsub.s32 0, %v1943
        %v1946 = vsel %vm1944, %v1945, %v1943
        %v1947 = vclz %v1946
        %v1948 = vsub.s32 %v1947, 2
        %vm1949 = vcmp.gt.s32.totalorder 0, %v1948
        %v1950 = vsel %vm1949, 0, %v1948
        %v1951 = vsub.s32 32, %v1950
        %v1952 = vshll.u32 %v1943, %v1950
        %v1953 = vshrl.u32 %v1935, %v1951
        %v1954 = vor.u32 %v1952, %v1953
        %v1955 = vsub.s32 4294967266, %v1950
        %v1956 = vadd.s32 %v1955, 127
        %v1957 = vshll.u32 %v1956, 23
        %v1958 = vor.u32 4788187, %v1957
        %v1959 = vand.u32 2147483647, %v1958
        %v1961 = vcvt.s32.f32 %v1954
        %v1962 = vmul.f32 %v1961, %v1959
        %v1963 = vxor.u32 %v1962, 2147483648
        %v1964 = vsel %vm1881, %v1963, %v1962
        %v1965 = vsub.s32 4, %v1941
        %v1966 = vsel %vm1881, %v1965, %v1941
        %v1967 = vsel %vm1880, %v318, %v1964
        %v1968 = vsel %vm1880, 0, %v1966
        %v1969 = vcosq.f32.pop %v1967
        %v1970 = vsinq.f32.pop %v1967
        %vm1971 = vweird.f32 %v318
        %v1972 = vadd.s32 %v1968, 3
        %v1973 = vand.u32 %v1972, 3
        %vm1974 = vcmp.lt.s32.totalorder %v1973, 2
        %vm1975 = vcmp.eq.s32.totalorder %v1973, 0
        %v1976 = vxor.u32 %v1970, 2147483648
        %v1977 = vsel %vm1975, %v1969, %v1976
        %vm1978 = vcmp.eq.s32.totalorder %v1973, 2
        %v1979 = vxor.u32 %v1969, 2147483648
        %v1980 = vsel %vm1978, %v1979, %v1970
        %v1981 = vsel %vm1974, %v1977, %v1980
        %v1982 = vsel %vm1971, nan, %v1981
        %1983 = vst [vmem:[%s175] sm:$0xff] %v422
        %1984 = vst [vmem:[%s175 + $0x8] sm:$0xff] %v526
        %1985 = vst [vmem:[%s175 + $0x10] sm:$0xff] %v630
        %1986 = vst [vmem:[%s175 + $0x18] sm:$0xff] %v734
        %1987 = vst [vmem:[%s175 + $0x20] sm:$0xff] %v838
        %1988 = vst [vmem:[%s175 + $0x28] sm:$0xff] %v942
        %1989 = vst [vmem:[%s175 + $0x30] sm:$0xff] %v1046
        %1990 = vst [vmem:[%s175 + $0x38] sm:$0xff] %v1150
        %1991 = vst [vmem:[%s175 + $0x40] sm:$0xff] %v1254
        %1992 = vst [vmem:[%s175 + $0x48] sm:$0xff] %v1358
        %1993 = vst [vmem:[%s175 + $0x50] sm:$0xff] %v1462
        %1994 = vst [vmem:[%s175 + $0x58] sm:$0xff] %v1566
        %1995 = vst [vmem:[%s175 + $0x60] sm:$0xff] %v1670
        %1996 = vst [vmem:[%s175 + $0x68] sm:$0xff] %v1774
        %1997 = vst [vmem:[%s175 + $0x70] sm:$0xff] %v1878
        %1998 = vst [vmem:[%s175 + $0x78] sm:$0xff] %v1982
        %s1999 = sand.u32 %s99, 1
        %s2000 = scalar_lea.sflag [#allocation3], %s1999
        %s2001 = sand.u32 %s99, 1
        %s2002 = smul.addr %s2001, 128
        %s2003 = scalar_lea.vmem [#allocation2], %s2002
        // Predicated region
        $region29: #{tpu_custom_call.1} parent=27 // pred_check
          %p2004 = pneg %p109
        $region30: #{tpu_custom_call.1} parent=27 // pred_check_branch
          %2006 = sbr.rel (%p2004) target = $region32
        $region31: #{tpu_custom_call.1} parent=27 // pred_region
          %s2007 = smul.u32 8, %s23
          %s2009 = ssub.s32 2048, 2048
          %2010 = vsyncadd %s2000, %s2009
          %s2011 = smul.addr %s2007, 2
          %s2012 = smul.addr %s22, 16
          %s2013 = sadd.s32 %s2011, %s2012
          %s2014 = smul.addr %s21, 32
          %s2015 = sadd.s32 %s2013, %s2014
          %s2016 = smul.addr %s2015, 128
          %s2017 = scalar_lea.hbm %s2, %s2016
          %s2018 = sshll.u32 %s2003, 4
          %s2019 = int_to_ptr.vmem [resolvable:$true] %s2018
          %2024 = dma.vmem_to_hbm [thread:$0]  %s2019, 2048, %s2017, %s2000, 256, 256, 16
        $region32: #{tpu_custom_call.1} parent=27 // pred_fallthru
          _
      $region28: #{tpu_custom_call.1} parent=5 // pred_fallthru
        _
      %p2025 = scmp.le.s32.totalorder 2, %s11
      // Predicated region
      $region33: #{tpu_custom_call.1} parent=5 // pred_check
        %p2026 = pneg %p2025
      $region34: #{tpu_custom_call.1} parent=5 // pred_check_branch
        %2028 = sbr.rel (%p2026) target = $region36
      $region35: #{tpu_custom_call.1} parent=5 // pred_region
        %s2029 = ssub.s32 %s11, 2
        // Predicated region
        $region37: #{tpu_custom_call.1} parent=35 // pred_check
          %p2030 = pneg %p115
        $region38: #{tpu_custom_call.1} parent=35 // pred_check_branch
          %2032 = sbr.rel (%p2030) target = $region40
        $region39: #{tpu_custom_call.1} parent=35 // pred_region
          %s2033 = sand.u32 %s100, 1
          %s2034 = scalar_lea.sflag [#allocation3], %s2033
          %s2035 = sand.u32 %s100, 1
          %s2036 = smul.addr %s2035, 128
          %s2037 = scalar_lea.vmem [#allocation2], %s2036
          %2038 = dma.done %s2034, 2048
        $region40: #{tpu_custom_call.1} parent=35 // pred_fallthru
          _
      $region36: #{tpu_custom_call.1} parent=5 // pred_fallthru
        _
    $region6: #{tpu_custom_call.1} parent=1 // loop_footer
      %s15 = sadd.s32 1, %s11
    $region7: #{tpu_custom_call.1} parent=1 // loop_footer_branch
      %10 = sbr.rel target = $region3
    $region8: #{tpu_custom_call.1} parent=1 // loop_exit
      _
    %2039 = vsyncpa [#allocation3], 1
    %s2040 = scalar_lea.sflag [#allocation3], 1
    %2041 = vsyncpa %s2040, 1

</llo_original>
